<compile_context>
chip_gen: v6e
topology: v6e:2x2x1
jax: 0.10.0
libtpu: 0.0.40
codegen_flags: <defaults>
</compile_context>

<pallas_src>
import functools

import jax
import jax.numpy as jnp
from jax.experimental import pallas as pl
from jax.experimental.pallas import tpu as pltpu

LN_EPS = 1e-5      # PyTorch layer_norm_eps default
OUT_PAD = 128      # lane-dense padded width for the final output block


# ------------------------------ fused kernel --------------------------------

def _layer_norm(y, g, b):
    mu = jnp.mean(y, axis=-1, keepdims=True)
    var = jnp.mean(jnp.square(y - mu), axis=-1, keepdims=True)
    return (y - mu) * jax.lax.rsqrt(var + LN_EPS) * g + b


def _model_kernel(x_ref, emb_w_ref, emb_b_ref,
                  w_in_ref, b_in_ref, w_out_ref, b_out_ref,
                  ln1_g_ref, ln1_b_ref, ln2_g_ref, ln2_b_ref,
                  w_ff1_ref, b_ff1_ref, w_ff2_ref, b_ff2_ref,
                  out_w_ref, out_b_ref,
                  o_ref, h_ref, *, S, B, H, nh):
    # TODO(synk): dropout layers are identity here (inference semantics).
    f32 = jnp.float32
    bf16 = jnp.bfloat16
    BS = S * B
    Dh = H // nh
    scale = 1.0 / (Dh ** 0.5)
    l = pl.program_id(0)

    # ---- layer 0: embedding Linear into the VMEM-resident activation scratch ----
    @pl.when(l == 0)
    def _():
        h_ref[...] = (jnp.dot(x_ref[...], emb_w_ref[...], preferred_element_type=f32)
                      + emb_b_ref[...])

    h = h_ref[...]                                        # (BS, H) f32, resident across layers

    # ---- self-attention: fused qkv projection + per-head attention + out-proj ----
    qkv = (jnp.dot(h.astype(bf16), w_in_ref[0], preferred_element_type=f32)
           + b_in_ref[0])                                 # (BS, 3H)

    # rows are seq-major flattened (row = s*B + b); mask pairs from different batches
    ri = jax.lax.broadcasted_iota(jnp.int32, (BS, BS), 0) % B
    ci = jax.lax.broadcasted_iota(jnp.int32, (BS, BS), 1) % B
    same_batch = ri == ci

    attn_acc = jnp.zeros((BS, H), f32)
    for hd in range(nh):                                  # static unroll over heads
        qh = qkv[:, hd * Dh:(hd + 1) * Dh].astype(bf16)
        kh = qkv[:, H + hd * Dh:H + (hd + 1) * Dh].astype(bf16)
        vh = qkv[:, 2 * H + hd * Dh:2 * H + (hd + 1) * Dh].astype(bf16)
        # q @ k^T without materializing an explicit transpose
        s = jax.lax.dot_general(qh, kh, (((1,), (1,)), ((), ())),
                                preferred_element_type=f32) * scale       # (BS, BS)
        s = jnp.where(same_batch, s, -1e30)
        s = s - jnp.max(s, axis=-1, keepdims=True)
        p = jnp.exp(s)
        p = p * pl.reciprocal(jnp.sum(p, axis=-1, keepdims=True), approx=True)
        oh = jnp.dot(p.astype(bf16), vh, preferred_element_type=f32)      # (BS, Dh)
        # accumulate this head's contribution to the output projection directly
        attn_acc = attn_acc + jnp.dot(oh.astype(bf16), w_out_ref[0, hd],
                                      preferred_element_type=f32)         # (BS, H)
    proj = attn_acc + b_out_ref[0]

    h1 = _layer_norm(h + proj, ln1_g_ref[0], ln1_b_ref[0])   # post-norm (norm_first=False)

    # ---- feed-forward (ReLU), fused bias + residual + LayerNorm epilogue ----
    ff = (jnp.dot(h1.astype(bf16), w_ff1_ref[0], preferred_element_type=f32)
          + b_ff1_ref[0])
    ff = jnp.maximum(ff, 0.0)
    ff = (jnp.dot(ff.astype(bf16), w_ff2_ref[0], preferred_element_type=f32)
          + b_ff2_ref[0])
    h2 = _layer_norm(h1 + ff, ln2_g_ref[0], ln2_b_ref[0])
    h_ref[...] = h2

    # ---- last layer: mean over sequence (selector matmul) + output Linear ----
    @pl.when(l == pl.num_programs(0) - 1)
    def _():
        rows = jax.lax.broadcasted_iota(jnp.int32, (B, BS), 0)
        cols = jax.lax.broadcasted_iota(jnp.int32, (B, BS), 1)
        sel = jnp.where(cols % B == rows, 1.0 / S, 0.0).astype(f32)       # (B, BS)
        hm = jnp.dot(sel, h2, preferred_element_type=f32)                 # (B, H)
        o_ref[...] = (jnp.dot(hm.astype(bf16), out_w_ref[...], preferred_element_type=f32)
                      + out_b_ref[...])                                   # (B, OUT_PAD)


def transformer_forward(x, params, num_heads):
    S, B, Din = x.shape
    H = params["emb_w"].shape[1]
    L = len(params["layers"])
    out_dim = params["out_w"].shape[1]
    nh = num_heads
    Dh = H // nh
    NP = max(OUT_PAD, out_dim)

    f32, bf16 = jnp.float32, jnp.bfloat16
    stack = lambda name: jnp.stack([lp[name] for lp in params["layers"]])

    # per-layer weights stacked on a leading L axis; matmul operands shipped in bf16
    w_in = stack("w_in").astype(bf16)                               # (L, H, 3H)
    b_in = stack("b_in")[:, None, :]                                # (L, 1, 3H)
    w_out = stack("w_out").reshape(L, nh, Dh, H).astype(bf16)       # (L, nh, Dh, H) head-major rows
    b_out = stack("b_out")[:, None, :]                              # (L, 1, H)
    ln1_g = stack("ln1_g")[:, None, :]
    ln1_b = stack("ln1_b")[:, None, :]
    ln2_g = stack("ln2_g")[:, None, :]
    ln2_b = stack("ln2_b")[:, None, :]
    w_ff1 = stack("w_ff1").astype(bf16)                             # (L, H, 4H)
    b_ff1 = stack("b_ff1")[:, None, :]
    w_ff2 = stack("w_ff2").astype(bf16)                             # (L, 4H, H)
    b_ff2 = stack("b_ff2")[:, None, :]

    emb_w = params["emb_w"].astype(bf16)
    emb_b = params["emb_b"].reshape(1, H)
    out_w = jnp.zeros((H, NP), f32).at[:, :out_dim].set(params["out_w"]).astype(bf16)
    out_b = jnp.zeros((1, NP), f32).at[:, :out_dim].set(params["out_b"])

    x2d = x.reshape(S * B, Din).astype(bf16)                        # seq-major rows (s*B + b)

    def whole(shape):       # same block every grid step (kept resident)
        return pl.BlockSpec(shape, lambda l: (0,) * len(shape))

    def per_layer(shape):   # one layer's slab per grid step (pipelined weight DMA)
        return pl.BlockSpec((1,) + shape, lambda l: (l,) + (0,) * len(shape))

    grid_spec = pltpu.PrefetchScalarGridSpec(
        num_scalar_prefetch=0,
        grid=(L,),
        in_specs=[
            whole((S * B, Din)),                                     # x
            whole((Din, H)), whole((1, H)),                          # embedding Linear
            per_layer((H, 3 * H)), per_layer((1, 3 * H)),            # attn in_proj
            per_layer((nh, Dh, H)), per_layer((1, H)),               # attn out_proj
            per_layer((1, H)), per_layer((1, H)),                    # ln1 gamma/beta
            per_layer((1, H)), per_layer((1, H)),                    # ln2 gamma/beta
            per_layer((H, 4 * H)), per_layer((1, 4 * H)),            # ffn linear1
            per_layer((4 * H, H)), per_layer((1, H)),                # ffn linear2
            whole((H, NP)), whole((1, NP)),                          # output Linear (padded)
        ],
        out_specs=pl.BlockSpec((B, NP), lambda l: (0, 0)),
        scratch_shapes=[pltpu.VMEM((S * B, H), f32)],                # resident activations
    )

    out = pl.pallas_call(
        functools.partial(_model_kernel, S=S, B=B, H=H, nh=nh),
        out_shape=jax.ShapeDtypeStruct((B, NP), f32),
        grid_spec=grid_spec,
        compiler_params=pltpu.CompilerParams(
            # layers are sequential (activation carried in VMEM scratch) -> "arbitrary"
            dimension_semantics=("arbitrary",),
            vmem_limit_bytes=32 * 1024 * 1024,
        ),
    )(x2d, emb_w, emb_b,
      w_in, b_in, w_out, b_out,
      ln1_g, ln1_b, ln2_g, ln2_b,
      w_ff1, b_ff1, w_ff2, b_ff2,
      out_w, out_b)
    return out[:, :out_dim]


# ------------------------------- params init --------------------------------

def init_params(key, input_dim, hidden_dim, num_layers, output_dim):
    def lin(k, fan_in, fan_out):
        k1, k2 = jax.random.split(k)
        bound = 1.0 / (fan_in ** 0.5)
        w = jax.random.uniform(k1, (fan_in, fan_out), jnp.float32, -bound, bound)
        b = jax.random.uniform(k2, (fan_out,), jnp.float32, -bound, bound)
        return w, b

    keys = jax.random.split(key, 2 + num_layers)
    emb_w, emb_b = lin(keys[0], input_dim, hidden_dim)
    out_w, out_b = lin(keys[1], hidden_dim, output_dim)

    layers = []
    for li in range(num_layers):
        lk = jax.random.split(keys[2 + li], 4)
        w_in, b_in = lin(lk[0], hidden_dim, 3 * hidden_dim)        # in_proj (q,k,v fused)
        w_out, b_out = lin(lk[1], hidden_dim, hidden_dim)          # attn out_proj
        w_ff1, b_ff1 = lin(lk[2], hidden_dim, 4 * hidden_dim)      # linear1
        w_ff2, b_ff2 = lin(lk[3], 4 * hidden_dim, hidden_dim)      # linear2
        layers.append(dict(
            w_in=w_in, b_in=b_in, w_out=w_out, b_out=b_out,
            w_ff1=w_ff1, b_ff1=b_ff1, w_ff2=w_ff2, b_ff2=b_ff2,
            ln1_g=jnp.ones((hidden_dim,), jnp.float32),
            ln1_b=jnp.zeros((hidden_dim,), jnp.float32),
            ln2_g=jnp.ones((hidden_dim,), jnp.float32),
            ln2_b=jnp.zeros((hidden_dim,), jnp.float32),
        ))
    return dict(emb_w=emb_w, emb_b=emb_b, out_w=out_w, out_b=out_b, layers=layers)


# ----------------------------- pure-JAX reference ----------------------------

def reference_forward(x, params, num_heads):
    hp = jax.lax.Precision.HIGHEST
    S, B, Din = x.shape
    H = params["emb_w"].shape[1]
    Dh = H // num_heads

    def ln(y, g, b):
        mu = jnp.mean(y, axis=-1, keepdims=True)
        var = jnp.mean(jnp.square(y - mu), axis=-1, keepdims=True)
        return (y - mu) * jax.lax.rsqrt(var + LN_EPS) * g + b

    h = jnp.dot(x.reshape(S * B, Din), params["emb_w"], precision=hp) + params["emb_b"]
    for lp in params["layers"]:
        qkv = jnp.dot(h, lp["w_in"], precision=hp) + lp["b_in"]
        q, k, v = jnp.split(qkv, 3, axis=-1)
        to_h = lambda t: t.reshape(S, B, num_heads, Dh).transpose(1, 2, 0, 3)
        q, k, v = to_h(q), to_h(k), to_h(v)
        s = jnp.einsum("bhqd,bhkd->bhqk", q, k, precision=hp) / (Dh ** 0.5)
        p = jax.nn.softmax(s, axis=-1)
        a = jnp.einsum("bhqk,bhkd->bhqd", p, v, precision=hp)
        a = a.transpose(2, 0, 1, 3).reshape(S * B, H)
        proj = jnp.dot(a, lp["w_out"], precision=hp) + lp["b_out"]
        h = ln(h + proj, lp["ln1_g"], lp["ln1_b"])
        ff = jnp.maximum(jnp.dot(h, lp["w_ff1"], precision=hp) + lp["b_ff1"], 0.0)
        ff = jnp.dot(ff, lp["w_ff2"], precision=hp) + lp["b_ff2"]
        h = ln(h + ff, lp["ln2_g"], lp["ln2_b"])
    hm = jnp.mean(h.reshape(S, B, H), axis=0)
    return jnp.dot(hm, params["out_w"], precision=hp) + params["out_b"]


# ------------------------------------ main -----------------------------------

if __name__ == "__main__":
    S, B = 8, 2
    input_dim, hidden_dim, num_layers, output_dim, num_heads = 16, 32, 2, 8, 4

    key = jax.random.PRNGKey(0)
    kx, kp = jax.random.split(key)
    x = jax.random.normal(kx, (S, B, input_dim), jnp.float32)
    params = init_params(kp, input_dim, hidden_dim, num_layers, output_dim)

    out = transformer_forward(x, params, num_heads)
    out = jax.block_until_ready(out)

    assert out.shape == (B, output_dim)
    assert bool(jnp.all(jnp.isfinite(out)))
    ref = reference_forward(x, params, num_heads)
    # kernel uses bf16 matmul operands (f32 accumulation); reference is f32 HIGHEST
    assert bool(jnp.allclose(out, ref, atol=3e-2, rtol=3e-2))

    print("KERNEL_OK")
</pallas_src>

<mosaic_0001>
module attributes {stable_mosaic.version = 11 : i64} {
  func.func @_model_kernel(%arg0: i32, %arg1: memref<16x16xbf16, #tpu.memory_space<vmem>>, %arg2: memref<16x32xbf16, #tpu.memory_space<vmem>>, %arg3: memref<1x32xf32, #tpu.memory_space<vmem>>, %arg4: memref<1x32x96xbf16, #tpu.memory_space<vmem>>, %arg5: memref<1x1x96xf32, #tpu.memory_space<vmem>>, %arg6: memref<1x4x8x32xbf16, #tpu.memory_space<vmem>>, %arg7: memref<1x1x32xf32, #tpu.memory_space<vmem>>, %arg8: memref<1x1x32xf32, #tpu.memory_space<vmem>>, %arg9: memref<1x1x32xf32, #tpu.memory_space<vmem>>, %arg10: memref<1x1x32xf32, #tpu.memory_space<vmem>>, %arg11: memref<1x1x32xf32, #tpu.memory_space<vmem>>, %arg12: memref<1x32x128xbf16, #tpu.memory_space<vmem>>, %arg13: memref<1x1x128xf32, #tpu.memory_space<vmem>>, %arg14: memref<1x128x32xbf16, #tpu.memory_space<vmem>>, %arg15: memref<1x1x32xf32, #tpu.memory_space<vmem>>, %arg16: memref<32x128xbf16, #tpu.memory_space<vmem>>, %arg17: memref<1x128xf32, #tpu.memory_space<vmem>>, %arg18: memref<2x128xf32, #tpu.memory_space<vmem>>, %arg19: memref<16x32xf32, #tpu.memory_space<vmem>>) attributes {dimension_semantics = [#tpu.dimension_semantics<arbitrary>], iteration_bounds = array<i64: 2>, scalar_prefetch = 0 : i64, scratch_operands = 1 : i64, tpu.core_type = #tpu.core_type<tc>, window_params = [{pipeline_mode = #tpu.pipeline_mode<synchronous>, transform_indices = @transform_0, window_bounds = array<i64: 16, 16>}, {pipeline_mode = #tpu.pipeline_mode<synchronous>, transform_indices = @transform_1, window_bounds = array<i64: 16, 32>}, {pipeline_mode = #tpu.pipeline_mode<synchronous>, transform_indices = @transform_2, window_bounds = array<i64: 1, 32>}, {transform_indices = @transform_3, window_bounds = array<i64: 1, 32, 96>}, {transform_indices = @transform_4, window_bounds = array<i64: 1, 1, 96>}, {transform_indices = @transform_5, window_bounds = array<i64: 1, 4, 8, 32>}, {transform_indices = @transform_6, window_bounds = array<i64: 1, 1, 32>}, {transform_indices = @transform_7, window_bounds = array<i64: 1, 1, 32>}, {transform_indices = @transform_8, window_bounds = array<i64: 1, 1, 32>}, {transform_indices = @transform_9, window_bounds = array<i64: 1, 1, 32>}, {transform_indices = @transform_10, window_bounds = array<i64: 1, 1, 32>}, {transform_indices = @transform_11, window_bounds = array<i64: 1, 32, 128>}, {transform_indices = @transform_12, window_bounds = array<i64: 1, 1, 128>}, {transform_indices = @transform_13, window_bounds = array<i64: 1, 128, 32>}, {transform_indices = @transform_14, window_bounds = array<i64: 1, 1, 32>}, {pipeline_mode = #tpu.pipeline_mode<synchronous>, transform_indices = @transform_15, window_bounds = array<i64: 32, 128>}, {pipeline_mode = #tpu.pipeline_mode<synchronous>, transform_indices = @transform_16, window_bounds = array<i64: 1, 128>}, {pipeline_mode = #tpu.pipeline_mode<synchronous>, transform_indices = @transform_17, window_bounds = array<i64: 2, 128>}]} {
    %c0_i32 = arith.constant 0 : i32
    %0 = arith.cmpi eq, %arg0, %c0_i32 : i32
    %1 = arith.extui %0 : i1 to i32
    %c0_i32_0 = arith.constant 0 : i32
    %2 = arith.cmpi ne, %1, %c0_i32_0 : i32
    scf.if %2 {
      %c0_104 = arith.constant 0 : index
      %c0_105 = arith.constant 0 : index
      %240 = vector.load %arg1[%c0_104, %c0_105] : memref<16x16xbf16, #tpu.memory_space<vmem>>, vector<16x16xbf16>
      %c0_106 = arith.constant 0 : index
      %c0_107 = arith.constant 0 : index
      %241 = vector.load %arg2[%c0_106, %c0_107] : memref<16x32xbf16, #tpu.memory_space<vmem>>, vector<16x32xbf16>
      %cst_108 = arith.constant dense<0.000000e+00> : vector<16x32xf32>
      %242 = tpu.matmul %240, %241, %cst_108 {dimension_numbers = #tpu.dot_dimension_numbers<[1], [0], [0], [1], [0, 0, 1, 1], [], []>} : vector<16x16xbf16>, vector<16x32xbf16>, vector<16x32xf32> -> vector<16x32xf32>
      %c0_109 = arith.constant 0 : index
      %c0_110 = arith.constant 0 : index
      %243 = vector.load %arg3[%c0_109, %c0_110] : memref<1x32xf32, #tpu.memory_space<vmem>>, vector<1x32xf32>
      %244 = vector.broadcast %243 : vector<1x32xf32> to vector<16x32xf32>
      %245 = arith.addf %242, %244 : vector<16x32xf32>
      %c0_111 = arith.constant 0 : index
      %c0_112 = arith.constant 0 : index
      %246 = vector.load %arg19[%c0_111, %c0_112] : memref<16x32xf32, #tpu.memory_space<vmem>>, vector<16x32xf32>
      tpu.vector_store %arg19[%c0_111, %c0_112], %245 {strides = array<i32>} : memref<16x32xf32, #tpu.memory_space<vmem>>, vector<16x32xf32>,
    } else {
    }
    %c0 = arith.constant 0 : index
    %c0_1 = arith.constant 0 : index
    %3 = vector.load %arg19[%c0, %c0_1] : memref<16x32xf32, #tpu.memory_space<vmem>>, vector<16x32xf32>
    %4 = arith.truncf %3 : vector<16x32xf32> to vector<16x32xbf16>
    %c0_2 = arith.constant 0 : index
    %c0_3 = arith.constant 0 : index
    %c0_4 = arith.constant 0 : index
    %5 = vector.load %arg4[%c0_2, %c0_3, %c0_4] : memref<1x32x96xbf16, #tpu.memory_space<vmem>>, vector<1x32x96xbf16>
    %6 = vector.shape_cast %5 : vector<1x32x96xbf16> to vector<32x96xbf16>
    %cst = arith.constant dense<0.000000e+00> : vector<16x96xf32>
    %7 = tpu.matmul %4, %6, %cst {dimension_numbers = #tpu.dot_dimension_numbers<[1], [0], [0], [1], [0, 0, 1, 1], [], []>} : vector<16x32xbf16>, vector<32x96xbf16>, vector<16x96xf32> -> vector<16x96xf32>
    %c0_5 = arith.constant 0 : index
    %c0_6 = arith.constant 0 : index
    %c0_7 = arith.constant 0 : index
    %8 = vector.load %arg5[%c0_5, %c0_6, %c0_7] : memref<1x1x96xf32, #tpu.memory_space<vmem>>, vector<1x1x96xf32>
    %9 = vector.shape_cast %8 : vector<1x1x96xf32> to vector<1x96xf32>
    %10 = vector.broadcast %9 : vector<1x96xf32> to vector<16x96xf32>
    %11 = arith.addf %7, %10 : vector<16x96xf32>
    %12 = tpu.iota {dimensions = array<i32: 0>} : vector<16x16xi32>
    %c2_i32 = arith.constant 2 : i32
    %c0_i32_8 = arith.constant 0 : i32
    %13 = arith.cmpi eq, %c2_i32, %c0_i32_8 : i32
    %c1_i32 = arith.constant 1 : i32
    %14 = arith.select %13, %c1_i32, %c2_i32 : i32
    %15 = vector.broadcast %14 : i32 to vector<16x16xi32>
    %16 = arith.remsi %12, %15 : vector<16x16xi32>
    %c0_i32_9 = arith.constant 0 : i32
    %17 = vector.broadcast %c0_i32_9 : i32 to vector<16x16xi32>
    %18 = arith.cmpi ne, %16, %17 : vector<16x16xi32>
    %c0_i32_10 = arith.constant 0 : i32
    %19 = vector.broadcast %c0_i32_10 : i32 to vector<16x16xi32>
    %20 = arith.cmpi slt, %16, %19 : vector<16x16xi32>
    %c0_i32_11 = arith.constant 0 : i32
    %21 = arith.cmpi slt, %14, %c0_i32_11 : i32
    %22 = vector.broadcast %21 : i1 to vector<16x16xi1>
    %23 = vector.broadcast %22 : vector<16x16xi1> to vector<16x16xi1>
    %24 = arith.xori %20, %23 : vector<16x16xi1>
    %25 = arith.andi %24, %18 : vector<16x16xi1>
    %26 = vector.broadcast %14 : i32 to vector<16x16xi32>
    %27 = arith.addi %16, %26 : vector<16x16xi32>
    %28 = arith.select %25, %27, %16 : vector<16x16xi1>, vector<16x16xi32>
    %29 = tpu.iota {dimensions = array<i32: 1>} : vector<16x16xi32>
    %c2_i32_12 = arith.constant 2 : i32
    %c0_i32_13 = arith.constant 0 : i32
    %30 = arith.cmpi eq, %c2_i32_12, %c0_i32_13 : i32
    %c1_i32_14 = arith.constant 1 : i32
    %31 = arith.select %30, %c1_i32_14, %c2_i32_12 : i32
    %32 = vector.broadcast %31 : i32 to vector<16x16xi32>
    %33 = arith.remsi %29, %32 : vector<16x16xi32>
    %c0_i32_15 = arith.constant 0 : i32
    %34 = vector.broadcast %c0_i32_15 : i32 to vector<16x16xi32>
    %35 = arith.cmpi ne, %33, %34 : vector<16x16xi32>
    %c0_i32_16 = arith.constant 0 : i32
    %36 = vector.broadcast %c0_i32_16 : i32 to vector<16x16xi32>
    %37 = arith.cmpi slt, %33, %36 : vector<16x16xi32>
    %c0_i32_17 = arith.constant 0 : i32
    %38 = arith.cmpi slt, %31, %c0_i32_17 : i32
    %39 = vector.broadcast %38 : i1 to vector<16x16xi1>
    %40 = vector.broadcast %39 : vector<16x16xi1> to vector<16x16xi1>
    %41 = arith.xori %37, %40 : vector<16x16xi1>
    %42 = arith.andi %41, %35 : vector<16x16xi1>
    %43 = vector.broadcast %31 : i32 to vector<16x16xi32>
    %44 = arith.addi %33, %43 : vector<16x16xi32>
    %45 = arith.select %42, %44, %33 : vector<16x16xi1>, vector<16x16xi32>
    %46 = arith.cmpi eq, %28, %45 : vector<16x16xi32>
    %cst_18 = arith.constant 0.000000e+00 : f32
    %47 = vector.broadcast %cst_18 : f32 to vector<16x32xf32>
    %48 = vector.extract_strided_slice %11 {offsets = [0, 0], sizes = [16, 8], strides = [1, 1]} : vector<16x96xf32> to vector<16x8xf32>
    %49 = arith.truncf %48 : vector<16x8xf32> to vector<16x8xbf16>
    %50 = vector.extract_strided_slice %11 {offsets = [0, 32], sizes = [16, 8], strides = [1, 1]} : vector<16x96xf32> to vector<16x8xf32>
    %51 = arith.truncf %50 : vector<16x8xf32> to vector<16x8xbf16>
    %52 = vector.extract_strided_slice %11 {offsets = [0, 64], sizes = [16, 8], strides = [1, 1]} : vector<16x96xf32> to vector<16x8xf32>
    %53 = arith.truncf %52 : vector<16x8xf32> to vector<16x8xbf16>
    %cst_19 = arith.constant dense<0.000000e+00> : vector<16x16xf32>
    %54 = tpu.matmul %49, %51, %cst_19 {dimension_numbers = #tpu.dot_dimension_numbers<[1], [1], [0], [0], [0, 0, 1, 0], [], []>} : vector<16x8xbf16>, vector<16x8xbf16>, vector<16x16xf32> -> vector<16x16xf32>
    %cst_20 = arith.constant 0.353553385 : f32
    %55 = vector.broadcast %cst_20 : f32 to vector<16x16xf32>
    %56 = arith.mulf %54, %55 : vector<16x16xf32>
    %cst_21 = arith.constant -1.000000e+30 : f32
    %57 = vector.broadcast %cst_21 : f32 to vector<16x16xf32>
    %58 = arith.select %46, %56, %57 : vector<16x16xi1>, vector<16x16xf32>
    %cst_22 = arith.constant dense<0xFF800000> : vector<16xf32>
    %59 = vector.multi_reduction <maximumf>, %58, %cst_22 [1] : vector<16x16xf32> to vector<16xf32>
    %60 = vector.shape_cast %59 : vector<16xf32> to vector<16x1xf32>
    %61 = vector.broadcast %60 : vector<16x1xf32> to vector<16x16xf32>
    %62 = arith.subf %58, %61 : vector<16x16xf32>
    %63 = math.exp %62 : vector<16x16xf32>
    %cst_23 = arith.constant dense<0.000000e+00> : vector<16xf32>
    %64 = vector.multi_reduction <add>, %63, %cst_23 [1] : vector<16x16xf32> to vector<16xf32>
    %65 = vector.shape_cast %64 : vector<16xf32> to vector<16x1xf32>
    %66 = tpu.reciprocal %65 {approx = true} : vector<16x1xf32> -> vector<16x1xf32>
    %67 = vector.broadcast %66 : vector<16x1xf32> to vector<16x16xf32>
    %68 = arith.mulf %63, %67 : vector<16x16xf32>
    %69 = arith.truncf %68 : vector<16x16xf32> to vector<16x16xbf16>
    %cst_24 = arith.constant dense<0.000000e+00> : vector<16x8xf32>
    %70 = tpu.matmul %69, %53, %cst_24 {dimension_numbers = #tpu.dot_dimension_numbers<[1], [0], [0], [1], [0, 0, 1, 1], [], []>} : vector<16x16xbf16>, vector<16x8xbf16>, vector<16x8xf32> -> vector<16x8xf32>
    %71 = arith.truncf %70 : vector<16x8xf32> to vector<16x8xbf16>
    %c0_25 = arith.constant 0 : index
    %c0_26 = arith.constant 0 : index
    %c0_27 = arith.constant 0 : index
    %c0_28 = arith.constant 0 : index
    %72 = vector.load %arg6[%c0_25, %c0_26, %c0_27, %c0_28] : memref<1x4x8x32xbf16, #tpu.memory_space<vmem>>, vector<1x1x8x32xbf16>
    %73 = vector.shape_cast %72 : vector<1x1x8x32xbf16> to vector<8x32xbf16>
    %cst_29 = arith.constant dense<0.000000e+00> : vector<16x32xf32>
    %74 = tpu.matmul %71, %73, %cst_29 {dimension_numbers = #tpu.dot_dimension_numbers<[1], [0], [0], [1], [0, 0, 1, 1], [], []>} : vector<16x8xbf16>, vector<8x32xbf16>, vector<16x32xf32> -> vector<16x32xf32>
    %75 = arith.addf %47, %74 : vector<16x32xf32>
    %76 = vector.extract_strided_slice %11 {offsets = [0, 8], sizes = [16, 8], strides = [1, 1]} : vector<16x96xf32> to vector<16x8xf32>
    %77 = arith.truncf %76 : vector<16x8xf32> to vector<16x8xbf16>
    %78 = vector.extract_strided_slice %11 {offsets = [0, 40], sizes = [16, 8], strides = [1, 1]} : vector<16x96xf32> to vector<16x8xf32>
    %79 = arith.truncf %78 : vector<16x8xf32> to vector<16x8xbf16>
    %80 = vector.extract_strided_slice %11 {offsets = [0, 72], sizes = [16, 8], strides = [1, 1]} : vector<16x96xf32> to vector<16x8xf32>
    %81 = arith.truncf %80 : vector<16x8xf32> to vector<16x8xbf16>
    %cst_30 = arith.constant dense<0.000000e+00> : vector<16x16xf32>
    %82 = tpu.matmul %77, %79, %cst_30 {dimension_numbers = #tpu.dot_dimension_numbers<[1], [1], [0], [0], [0, 0, 1, 0], [], []>} : vector<16x8xbf16>, vector<16x8xbf16>, vector<16x16xf32> -> vector<16x16xf32>
    %cst_31 = arith.constant 0.353553385 : f32
    %83 = vector.broadcast %cst_31 : f32 to vector<16x16xf32>
    %84 = arith.mulf %82, %83 : vector<16x16xf32>
    %cst_32 = arith.constant -1.000000e+30 : f32
    %85 = vector.broadcast %cst_32 : f32 to vector<16x16xf32>
    %86 = arith.select %46, %84, %85 : vector<16x16xi1>, vector<16x16xf32>
    %cst_33 = arith.constant dense<0xFF800000> : vector<16xf32>
    %87 = vector.multi_reduction <maximumf>, %86, %cst_33 [1] : vector<16x16xf32> to vector<16xf32>
    %88 = vector.shape_cast %87 : vector<16xf32> to vector<16x1xf32>
    %89 = vector.broadcast %88 : vector<16x1xf32> to vector<16x16xf32>
    %90 = arith.subf %86, %89 : vector<16x16xf32>
    %91 = math.exp %90 : vector<16x16xf32>
    %cst_34 = arith.constant dense<0.000000e+00> : vector<16xf32>
    %92 = vector.multi_reduction <add>, %91, %cst_34 [1] : vector<16x16xf32> to vector<16xf32>
    %93 = vector.shape_cast %92 : vector<16xf32> to vector<16x1xf32>
    %94 = tpu.reciprocal %93 {approx = true} : vector<16x1xf32> -> vector<16x1xf32>
    %95 = vector.broadcast %94 : vector<16x1xf32> to vector<16x16xf32>
    %96 = arith.mulf %91, %95 : vector<16x16xf32>
    %97 = arith.truncf %96 : vector<16x16xf32> to vector<16x16xbf16>
    %cst_35 = arith.constant dense<0.000000e+00> : vector<16x8xf32>
    %98 = tpu.matmul %97, %81, %cst_35 {dimension_numbers = #tpu.dot_dimension_numbers<[1], [0], [0], [1], [0, 0, 1, 1], [], []>} : vector<16x16xbf16>, vector<16x8xbf16>, vector<16x8xf32> -> vector<16x8xf32>
    %99 = arith.truncf %98 : vector<16x8xf32> to vector<16x8xbf16>
    %c0_36 = arith.constant 0 : index
    %c1 = arith.constant 1 : index
    %c0_37 = arith.constant 0 : index
    %c0_38 = arith.constant 0 : index
    %100 = vector.load %arg6[%c0_36, %c1, %c0_37, %c0_38] : memref<1x4x8x32xbf16, #tpu.memory_space<vmem>>, vector<1x1x8x32xbf16>
    %101 = vector.shape_cast %100 : vector<1x1x8x32xbf16> to vector<8x32xbf16>
    %cst_39 = arith.constant dense<0.000000e+00> : vector<16x32xf32>
    %102 = tpu.matmul %99, %101, %cst_39 {dimension_numbers = #tpu.dot_dimension_numbers<[1], [0], [0], [1], [0, 0, 1, 1], [], []>} : vector<16x8xbf16>, vector<8x32xbf16>, vector<16x32xf32> -> vector<16x32xf32>
    %103 = arith.addf %75, %102 : vector<16x32xf32>
    %104 = vector.extract_strided_slice %11 {offsets = [0, 16], sizes = [16, 8], strides = [1, 1]} : vector<16x96xf32> to vector<16x8xf32>
    %105 = arith.truncf %104 : vector<16x8xf32> to vector<16x8xbf16>
    %106 = vector.extract_strided_slice %11 {offsets = [0, 48], sizes = [16, 8], strides = [1, 1]} : vector<16x96xf32> to vector<16x8xf32>
    %107 = arith.truncf %106 : vector<16x8xf32> to vector<16x8xbf16>
    %108 = vector.extract_strided_slice %11 {offsets = [0, 80], sizes = [16, 8], strides = [1, 1]} : vector<16x96xf32> to vector<16x8xf32>
    %109 = arith.truncf %108 : vector<16x8xf32> to vector<16x8xbf16>
    %cst_40 = arith.constant dense<0.000000e+00> : vector<16x16xf32>
    %110 = tpu.matmul %105, %107, %cst_40 {dimension_numbers = #tpu.dot_dimension_numbers<[1], [1], [0], [0], [0, 0, 1, 0], [], []>} : vector<16x8xbf16>, vector<16x8xbf16>, vector<16x16xf32> -> vector<16x16xf32>
    %cst_41 = arith.constant 0.353553385 : f32
    %111 = vector.broadcast %cst_41 : f32 to vector<16x16xf32>
    %112 = arith.mulf %110, %111 : vector<16x16xf32>
    %cst_42 = arith.constant -1.000000e+30 : f32
    %113 = vector.broadcast %cst_42 : f32 to vector<16x16xf32>
    %114 = arith.select %46, %112, %113 : vector<16x16xi1>, vector<16x16xf32>
    %cst_43 = arith.constant dense<0xFF800000> : vector<16xf32>
    %115 = vector.multi_reduction <maximumf>, %114, %cst_43 [1] : vector<16x16xf32> to vector<16xf32>
    %116 = vector.shape_cast %115 : vector<16xf32> to vector<16x1xf32>
    %117 = vector.broadcast %116 : vector<16x1xf32> to vector<16x16xf32>
    %118 = arith.subf %114, %117 : vector<16x16xf32>
    %119 = math.exp %118 : vector<16x16xf32>
    %cst_44 = arith.constant dense<0.000000e+00> : vector<16xf32>
    %120 = vector.multi_reduction <add>, %119, %cst_44 [1] : vector<16x16xf32> to vector<16xf32>
    %121 = vector.shape_cast %120 : vector<16xf32> to vector<16x1xf32>
    %122 = tpu.reciprocal %121 {approx = true} : vector<16x1xf32> -> vector<16x1xf32>
    %123 = vector.broadcast %122 : vector<16x1xf32> to vector<16x16xf32>
    %124 = arith.mulf %119, %123 : vector<16x16xf32>
    %125 = arith.truncf %124 : vector<16x16xf32> to vector<16x16xbf16>
    %cst_45 = arith.constant dense<0.000000e+00> : vector<16x8xf32>
    %126 = tpu.matmul %125, %109, %cst_45 {dimension_numbers = #tpu.dot_dimension_numbers<[1], [0], [0], [1], [0, 0, 1, 1], [], []>} : vector<16x16xbf16>, vector<16x8xbf16>, vector<16x8xf32> -> vector<16x8xf32>
    %127 = arith.truncf %126 : vector<16x8xf32> to vector<16x8xbf16>
    %c0_46 = arith.constant 0 : index
    %c2 = arith.constant 2 : index
    %c0_47 = arith.constant 0 : index
    %c0_48 = arith.constant 0 : index
    %128 = vector.load %arg6[%c0_46, %c2, %c0_47, %c0_48] : memref<1x4x8x32xbf16, #tpu.memory_space<vmem>>, vector<1x1x8x32xbf16>
    %129 = vector.shape_cast %128 : vector<1x1x8x32xbf16> to vector<8x32xbf16>
    %cst_49 = arith.constant dense<0.000000e+00> : vector<16x32xf32>
    %130 = tpu.matmul %127, %129, %cst_49 {dimension_numbers = #tpu.dot_dimension_numbers<[1], [0], [0], [1], [0, 0, 1, 1], [], []>} : vector<16x8xbf16>, vector<8x32xbf16>, vector<16x32xf32> -> vector<16x32xf32>
    %131 = arith.addf %103, %130 : vector<16x32xf32>
    %132 = vector.extract_strided_slice %11 {offsets = [0, 24], sizes = [16, 8], strides = [1, 1]} : vector<16x96xf32> to vector<16x8xf32>
    %133 = arith.truncf %132 : vector<16x8xf32> to vector<16x8xbf16>
    %134 = vector.extract_strided_slice %11 {offsets = [0, 56], sizes = [16, 8], strides = [1, 1]} : vector<16x96xf32> to vector<16x8xf32>
    %135 = arith.truncf %134 : vector<16x8xf32> to vector<16x8xbf16>
    %136 = vector.extract_strided_slice %11 {offsets = [0, 88], sizes = [16, 8], strides = [1, 1]} : vector<16x96xf32> to vector<16x8xf32>
    %137 = arith.truncf %136 : vector<16x8xf32> to vector<16x8xbf16>
    %cst_50 = arith.constant dense<0.000000e+00> : vector<16x16xf32>
    %138 = tpu.matmul %133, %135, %cst_50 {dimension_numbers = #tpu.dot_dimension_numbers<[1], [1], [0], [0], [0, 0, 1, 0], [], []>} : vector<16x8xbf16>, vector<16x8xbf16>, vector<16x16xf32> -> vector<16x16xf32>
    %cst_51 = arith.constant 0.353553385 : f32
    %139 = vector.broadcast %cst_51 : f32 to vector<16x16xf32>
    %140 = arith.mulf %138, %139 : vector<16x16xf32>
    %cst_52 = arith.constant -1.000000e+30 : f32
    %141 = vector.broadcast %cst_52 : f32 to vector<16x16xf32>
    %142 = arith.select %46, %140, %141 : vector<16x16xi1>, vector<16x16xf32>
    %cst_53 = arith.constant dense<0xFF800000> : vector<16xf32>
    %143 = vector.multi_reduction <maximumf>, %142, %cst_53 [1] : vector<16x16xf32> to vector<16xf32>
    %144 = vector.shape_cast %143 : vector<16xf32> to vector<16x1xf32>
    %145 = vector.broadcast %144 : vector<16x1xf32> to vector<16x16xf32>
    %146 = arith.subf %142, %145 : vector<16x16xf32>
    %147 = math.exp %146 : vector<16x16xf32>
    %cst_54 = arith.constant dense<0.000000e+00> : vector<16xf32>
    %148 = vector.multi_reduction <add>, %147, %cst_54 [1] : vector<16x16xf32> to vector<16xf32>
    %149 = vector.shape_cast %148 : vector<16xf32> to vector<16x1xf32>
    %150 = tpu.reciprocal %149 {approx = true} : vector<16x1xf32> -> vector<16x1xf32>
    %151 = vector.broadcast %150 : vector<16x1xf32> to vector<16x16xf32>
    %152 = arith.mulf %147, %151 : vector<16x16xf32>
    %153 = arith.truncf %152 : vector<16x16xf32> to vector<16x16xbf16>
    %cst_55 = arith.constant dense<0.000000e+00> : vector<16x8xf32>
    %154 = tpu.matmul %153, %137, %cst_55 {dimension_numbers = #tpu.dot_dimension_numbers<[1], [0], [0], [1], [0, 0, 1, 1], [], []>} : vector<16x16xbf16>, vector<16x8xbf16>, vector<16x8xf32> -> vector<16x8xf32>
    %155 = arith.truncf %154 : vector<16x8xf32> to vector<16x8xbf16>
    %c0_56 = arith.constant 0 : index
    %c3 = arith.constant 3 : index
    %c0_57 = arith.constant 0 : index
    %c0_58 = arith.constant 0 : index
    %156 = vector.load %arg6[%c0_56, %c3, %c0_57, %c0_58] : memref<1x4x8x32xbf16, #tpu.memory_space<vmem>>, vector<1x1x8x32xbf16>
    %157 = vector.shape_cast %156 : vector<1x1x8x32xbf16> to vector<8x32xbf16>
    %cst_59 = arith.constant dense<0.000000e+00> : vector<16x32xf32>
    %158 = tpu.matmul %155, %157, %cst_59 {dimension_numbers = #tpu.dot_dimension_numbers<[1], [0], [0], [1], [0, 0, 1, 1], [], []>} : vector<16x8xbf16>, vector<8x32xbf16>, vector<16x32xf32> -> vector<16x32xf32>
    %159 = arith.addf %131, %158 : vector<16x32xf32>
    %c0_60 = arith.constant 0 : index
    %c0_61 = arith.constant 0 : index
    %c0_62 = arith.constant 0 : index
    %160 = vector.load %arg7[%c0_60, %c0_61, %c0_62] : memref<1x1x32xf32, #tpu.memory_space<vmem>>, vector<1x1x32xf32>
    %161 = vector.shape_cast %160 : vector<1x1x32xf32> to vector<1x32xf32>
    %162 = vector.broadcast %161 : vector<1x32xf32> to vector<16x32xf32>
    %163 = arith.addf %159, %162 : vector<16x32xf32>
    %164 = arith.addf %3, %163 : vector<16x32xf32>
    %c0_63 = arith.constant 0 : index
    %c0_64 = arith.constant 0 : index
    %c0_65 = arith.constant 0 : index
    %165 = vector.load %arg8[%c0_63, %c0_64, %c0_65] : memref<1x1x32xf32, #tpu.memory_space<vmem>>, vector<1x1x32xf32>
    %166 = vector.shape_cast %165 : vector<1x1x32xf32> to vector<1x32xf32>
    %c0_66 = arith.constant 0 : index
    %c0_67 = arith.constant 0 : index
    %c0_68 = arith.constant 0 : index
    %167 = vector.load %arg9[%c0_66, %c0_67, %c0_68] : memref<1x1x32xf32, #tpu.memory_space<vmem>>, vector<1x1x32xf32>
    %168 = vector.shape_cast %167 : vector<1x1x32xf32> to vector<1x32xf32>
    %cst_69 = arith.constant dense<0.000000e+00> : vector<16xf32>
    %169 = vector.multi_reduction <add>, %164, %cst_69 [1] : vector<16x32xf32> to vector<16xf32>
    %170 = vector.shape_cast %169 : vector<16xf32> to vector<16x1xf32>
    %cst_70 = arith.constant 3.200000e+01 : f32
    %171 = vector.broadcast %cst_70 : f32 to vector<16x1xf32>
    %172 = arith.divf %170, %171 : vector<16x1xf32>
    %173 = vector.broadcast %172 : vector<16x1xf32> to vector<16x32xf32>
    %174 = arith.subf %164, %173 : vector<16x32xf32>
    %175 = arith.mulf %174, %174 : vector<16x32xf32>
    %cst_71 = arith.constant dense<0.000000e+00> : vector<16xf32>
    %176 = vector.multi_reduction <add>, %175, %cst_71 [1] : vector<16x32xf32> to vector<16xf32>
    %177 = vector.shape_cast %176 : vector<16xf32> to vector<16x1xf32>
    %cst_72 = arith.constant 3.200000e+01 : f32
    %178 = vector.broadcast %cst_72 : f32 to vector<16x1xf32>
    %179 = arith.divf %177, %178 : vector<16x1xf32>
    %180 = vector.broadcast %172 : vector<16x1xf32> to vector<16x32xf32>
    %181 = arith.subf %164, %180 : vector<16x32xf32>
    %cst_73 = arith.constant 9.99999974E-6 : f32
    %182 = vector.broadcast %cst_73 : f32 to vector<16x1xf32>
    %183 = arith.addf %179, %182 : vector<16x1xf32>
    %184 = math.rsqrt %183 : vector<16x1xf32>
    %185 = vector.broadcast %184 : vector<16x1xf32> to vector<16x32xf32>
    %186 = arith.mulf %181, %185 : vector<16x32xf32>
    %187 = vector.broadcast %166 : vector<1x32xf32> to vector<16x32xf32>
    %188 = arith.mulf %186, %187 : vector<16x32xf32>
    %189 = vector.broadcast %168 : vector<1x32xf32> to vector<16x32xf32>
    %190 = arith.addf %188, %189 : vector<16x32xf32>
    %191 = arith.truncf %190 : vector<16x32xf32> to vector<16x32xbf16>
    %c0_74 = arith.constant 0 : index
    %c0_75 = arith.constant 0 : index
    %c0_76 = arith.constant 0 : index
    %192 = vector.load %arg12[%c0_74, %c0_75, %c0_76] : memref<1x32x128xbf16, #tpu.memory_space<vmem>>, vector<1x32x128xbf16>
    %193 = vector.shape_cast %192 : vector<1x32x128xbf16> to vector<32x128xbf16>
    %cst_77 = arith.constant dense<0.000000e+00> : vector<16x128xf32>
    %194 = tpu.matmul %191, %193, %cst_77 {dimension_numbers = #tpu.dot_dimension_numbers<[1], [0], [0], [1], [0, 0, 1, 1], [], []>} : vector<16x32xbf16>, vector<32x128xbf16>, vector<16x128xf32> -> vector<16x128xf32>
    %c0_78 = arith.constant 0 : index
    %c0_79 = arith.constant 0 : index
    %c0_80 = arith.constant 0 : index
    %195 = vector.load %arg13[%c0_78, %c0_79, %c0_80] : memref<1x1x128xf32, #tpu.memory_space<vmem>>, vector<1x1x128xf32>
    %196 = vector.shape_cast %195 : vector<1x1x128xf32> to vector<1x128xf32>
    %197 = vector.broadcast %196 : vector<1x128xf32> to vector<16x128xf32>
    %198 = arith.addf %194, %197 : vector<16x128xf32>
    %cst_81 = arith.constant 0.000000e+00 : f32
    %199 = vector.broadcast %cst_81 : f32 to vector<16x128xf32>
    %200 = arith.maximumf %198, %199 : vector<16x128xf32>
    %201 = arith.truncf %200 : vector<16x128xf32> to vector<16x128xbf16>
    %c0_82 = arith.constant 0 : index
    %c0_83 = arith.constant 0 : index
    %c0_84 = arith.constant 0 : index
    %202 = vector.load %arg14[%c0_82, %c0_83, %c0_84] : memref<1x128x32xbf16, #tpu.memory_space<vmem>>, vector<1x128x32xbf16>
    %203 = vector.shape_cast %202 : vector<1x128x32xbf16> to vector<128x32xbf16>
    %cst_85 = arith.constant dense<0.000000e+00> : vector<16x32xf32>
    %204 = tpu.matmul %201, %203, %cst_85 {dimension_numbers = #tpu.dot_dimension_numbers<[1], [0], [0], [1], [0, 0, 1, 1], [], []>} : vector<16x128xbf16>, vector<128x32xbf16>, vector<16x32xf32> -> vector<16x32xf32>
    %c0_86 = arith.constant 0 : index
    %c0_87 = arith.constant 0 : index
    %c0_88 = arith.constant 0 : index
    %205 = vector.load %arg15[%c0_86, %c0_87, %c0_88] : memref<1x1x32xf32, #tpu.memory_space<vmem>>, vector<1x1x32xf32>
    %206 = vector.shape_cast %205 : vector<1x1x32xf32> to vector<1x32xf32>
    %207 = vector.broadcast %206 : vector<1x32xf32> to vector<16x32xf32>
    %208 = arith.addf %204, %207 : vector<16x32xf32>
    %209 = arith.addf %190, %208 : vector<16x32xf32>
    %c0_89 = arith.constant 0 : index
    %c0_90 = arith.constant 0 : index
    %c0_91 = arith.constant 0 : index
    %210 = vector.load %arg10[%c0_89, %c0_90, %c0_91] : memref<1x1x32xf32, #tpu.memory_space<vmem>>, vector<1x1x32xf32>
    %211 = vector.shape_cast %210 : vector<1x1x32xf32> to vector<1x32xf32>
    %c0_92 = arith.constant 0 : index
    %c0_93 = arith.constant 0 : index
    %c0_94 = arith.constant 0 : index
    %212 = vector.load %arg11[%c0_92, %c0_93, %c0_94] : memref<1x1x32xf32, #tpu.memory_space<vmem>>, vector<1x1x32xf32>
    %213 = vector.shape_cast %212 : vector<1x1x32xf32> to vector<1x32xf32>
    %cst_95 = arith.constant dense<0.000000e+00> : vector<16xf32>
    %214 = vector.multi_reduction <add>, %209, %cst_95 [1] : vector<16x32xf32> to vector<16xf32>
    %215 = vector.shape_cast %214 : vector<16xf32> to vector<16x1xf32>
    %cst_96 = arith.constant 3.200000e+01 : f32
    %216 = vector.broadcast %cst_96 : f32 to vector<16x1xf32>
    %217 = arith.divf %215, %216 : vector<16x1xf32>
    %218 = vector.broadcast %217 : vector<16x1xf32> to vector<16x32xf32>
    %219 = arith.subf %209, %218 : vector<16x32xf32>
    %220 = arith.mulf %219, %219 : vector<16x32xf32>
    %cst_97 = arith.constant dense<0.000000e+00> : vector<16xf32>
    %221 = vector.multi_reduction <add>, %220, %cst_97 [1] : vector<16x32xf32> to vector<16xf32>
    %222 = vector.shape_cast %221 : vector<16xf32> to vector<16x1xf32>
    %cst_98 = arith.constant 3.200000e+01 : f32
    %223 = vector.broadcast %cst_98 : f32 to vector<16x1xf32>
    %224 = arith.divf %222, %223 : vector<16x1xf32>
    %225 = vector.broadcast %217 : vector<16x1xf32> to vector<16x32xf32>
    %226 = arith.subf %209, %225 : vector<16x32xf32>
    %cst_99 = arith.constant 9.99999974E-6 : f32
    %227 = vector.broadcast %cst_99 : f32 to vector<16x1xf32>
    %228 = arith.addf %224, %227 : vector<16x1xf32>
    %229 = math.rsqrt %228 : vector<16x1xf32>
    %230 = vector.broadcast %229 : vector<16x1xf32> to vector<16x32xf32>
    %231 = arith.mulf %226, %230 : vector<16x32xf32>
    %232 = vector.broadcast %211 : vector<1x32xf32> to vector<16x32xf32>
    %233 = arith.mulf %231, %232 : vector<16x32xf32>
    %234 = vector.broadcast %213 : vector<1x32xf32> to vector<16x32xf32>
    %235 = arith.addf %233, %234 : vector<16x32xf32>
    %c0_100 = arith.constant 0 : index
    %c0_101 = arith.constant 0 : index
    %236 = vector.load %arg19[%c0_100, %c0_101] : memref<16x32xf32, #tpu.memory_space<vmem>>, vector<16x32xf32>
    tpu.vector_store %arg19[%c0_100, %c0_101], %235 {strides = array<i32>} : memref<16x32xf32, #tpu.memory_space<vmem>>, vector<16x32xf32>,
    %c1_i32_102 = arith.constant 1 : i32
    %237 = arith.cmpi eq, %arg0, %c1_i32_102 : i32
    %238 = arith.extui %237 : i1 to i32
    %c0_i32_103 = arith.constant 0 : i32
    %239 = arith.cmpi ne, %238, %c0_i32_103 : i32
    scf.if %239 {
      %240 = tpu.iota {dimensions = array<i32: 0>} : vector<2x16xi32>
      %241 = tpu.iota {dimensions = array<i32: 1>} : vector<2x16xi32>
      %c2_i32_104 = arith.constant 2 : i32
      %c0_i32_105 = arith.constant 0 : i32
      %242 = arith.cmpi eq, %c2_i32_104, %c0_i32_105 : i32
      %c1_i32_106 = arith.constant 1 : i32
      %243 = arith.select %242, %c1_i32_106, %c2_i32_104 : i32
      %244 = vector.broadcast %243 : i32 to vector<2x16xi32>
      %245 = arith.remsi %241, %244 : vector<2x16xi32>
      %c0_i32_107 = arith.constant 0 : i32
      %246 = vector.broadcast %c0_i32_107 : i32 to vector<2x16xi32>
      %247 = arith.cmpi ne, %245, %246 : vector<2x16xi32>
      %c0_i32_108 = arith.constant 0 : i32
      %248 = vector.broadcast %c0_i32_108 : i32 to vector<2x16xi32>
      %249 = arith.cmpi slt, %245, %248 : vector<2x16xi32>
      %c0_i32_109 = arith.constant 0 : i32
      %250 = arith.cmpi slt, %243, %c0_i32_109 : i32
      %251 = vector.broadcast %250 : i1 to vector<2x16xi1>
      %252 = vector.broadcast %251 : vector<2x16xi1> to vector<2x16xi1>
      %253 = arith.xori %249, %252 : vector<2x16xi1>
      %254 = arith.andi %253, %247 : vector<2x16xi1>
      %255 = vector.broadcast %243 : i32 to vector<2x16xi32>
      %256 = arith.addi %245, %255 : vector<2x16xi32>
      %257 = arith.select %254, %256, %245 : vector<2x16xi1>, vector<2x16xi32>
      %258 = arith.cmpi eq, %257, %240 : vector<2x16xi32>
      %cst_110 = arith.constant 1.250000e-01 : f32
      %cst_111 = arith.constant 0.000000e+00 : f32
      %259 = vector.broadcast %cst_110 : f32 to vector<2x16xf32>
      %260 = vector.broadcast %cst_111 : f32 to vector<2x16xf32>
      %261 = arith.select %258, %259, %260 : vector<2x16xi1>, vector<2x16xf32>
      %cst_112 = arith.constant dense<0.000000e+00> : vector<2x32xf32>
      %262 = tpu.matmul %261, %235, %cst_112 {dimension_numbers = #tpu.dot_dimension_numbers<[1], [0], [0], [1], [0, 0, 1, 1], [], []>} : vector<2x16xf32>, vector<16x32xf32>, vector<2x32xf32> -> vector<2x32xf32>
      %263 = arith.truncf %262 : vector<2x32xf32> to vector<2x32xbf16>
      %c0_113 = arith.constant 0 : index
      %c0_114 = arith.constant 0 : index
      %264 = vector.load %arg16[%c0_113, %c0_114] : memref<32x128xbf16, #tpu.memory_space<vmem>>, vector<32x128xbf16>
      %cst_115 = arith.constant dense<0.000000e+00> : vector<2x128xf32>
      %265 = tpu.matmul %263, %264, %cst_115 {dimension_numbers = #tpu.dot_dimension_numbers<[1], [0], [0], [1], [0, 0, 1, 1], [], []>} : vector<2x32xbf16>, vector<32x128xbf16>, vector<2x128xf32> -> vector<2x128xf32>
      %c0_116 = arith.constant 0 : index
      %c0_117 = arith.constant 0 : index
      %266 = vector.load %arg17[%c0_116, %c0_117] : memref<1x128xf32, #tpu.memory_space<vmem>>, vector<1x128xf32>
      %267 = vector.broadcast %266 : vector<1x128xf32> to vector<2x128xf32>
      %268 = arith.addf %265, %267 : vector<2x128xf32>
      %c0_118 = arith.constant 0 : index
      %c0_119 = arith.constant 0 : index
      %269 = vector.load %arg18[%c0_118, %c0_119] : memref<2x128xf32, #tpu.memory_space<vmem>>, vector<2x128xf32>
      tpu.vector_store %arg18[%c0_118, %c0_119], %268 {strides = array<i32>} : memref<2x128xf32, #tpu.memory_space<vmem>>, vector<2x128xf32>,
    } else {
    }
    return
  }
  func.func @transform_0(%arg0: i32) -> (i32, i32) {
    %c0_i32 = arith.constant 0 : i32
    %c0_i32_0 = arith.constant 0 : i32
    %c0_i32_1 = arith.constant 0 : i32
    return %c0_i32, %c0_i32_0 : i32, i32
  }
  func.func @transform_1(%arg0: i32) -> (i32, i32) {
    %c0_i32 = arith.constant 0 : i32
    %c0_i32_0 = arith.constant 0 : i32
    %c0_i32_1 = arith.constant 0 : i32
    return %c0_i32, %c0_i32_0 : i32, i32
  }
  func.func @transform_2(%arg0: i32) -> (i32, i32) {
    %c0_i32 = arith.constant 0 : i32
    %c0_i32_0 = arith.constant 0 : i32
    %c0_i32_1 = arith.constant 0 : i32
    return %c0_i32, %c0_i32_0 : i32, i32
  }
  func.func @transform_3(%arg0: i32) -> (i32, i32, i32) {
    %c0_i32 = arith.constant 0 : i32
    %c0_i32_0 = arith.constant 0 : i32
    %c0_i32_1 = arith.constant 0 : i32
    return %arg0, %c0_i32, %c0_i32_0 : i32, i32, i32
  }
  func.func @transform_4(%arg0: i32) -> (i32, i32, i32) {
    %c0_i32 = arith.constant 0 : i32
    %c0_i32_0 = arith.constant 0 : i32
    %c0_i32_1 = arith.constant 0 : i32
    return %arg0, %c0_i32, %c0_i32_0 : i32, i32, i32
  }
  func.func @transform_5(%arg0: i32) -> (i32, i32, i32, i32) {
    %c0_i32 = arith.constant 0 : i32
    %c0_i32_0 = arith.constant 0 : i32
    %c0_i32_1 = arith.constant 0 : i32
    %c0_i32_2 = arith.constant 0 : i32
    return %arg0, %c0_i32, %c0_i32_0, %c0_i32_1 : i32, i32, i32, i32
  }
  func.func @transform_6(%arg0: i32) -> (i32, i32, i32) {
    %c0_i32 = arith.constant 0 : i32
    %c0_i32_0 = arith.constant 0 : i32
    %c0_i32_1 = arith.constant 0 : i32
    return %arg0, %c0_i32, %c0_i32_0 : i32, i32, i32
  }
  func.func @transform_7(%arg0: i32) -> (i32, i32, i32) {
    %c0_i32 = arith.constant 0 : i32
    %c0_i32_0 = arith.constant 0 : i32
    %c0_i32_1 = arith.constant 0 : i32
    return %arg0, %c0_i32, %c0_i32_0 : i32, i32, i32
  }
  func.func @transform_8(%arg0: i32) -> (i32, i32, i32) {
    %c0_i32 = arith.constant 0 : i32
    %c0_i32_0 = arith.constant 0 : i32
    %c0_i32_1 = arith.constant 0 : i32
    return %arg0, %c0_i32, %c0_i32_0 : i32, i32, i32
  }
  func.func @transform_9(%arg0: i32) -> (i32, i32, i32) {
    %c0_i32 = arith.constant 0 : i32
    %c0_i32_0 = arith.constant 0 : i32
    %c0_i32_1 = arith.constant 0 : i32
    return %arg0, %c0_i32, %c0_i32_0 : i32, i32, i32
  }
  func.func @transform_10(%arg0: i32) -> (i32, i32, i32) {
    %c0_i32 = arith.constant 0 : i32
    %c0_i32_0 = arith.constant 0 : i32
    %c0_i32_1 = arith.constant 0 : i32
    return %arg0, %c0_i32, %c0_i32_0 : i32, i32, i32
  }
  func.func @transform_11(%arg0: i32) -> (i32, i32, i32) {
    %c0_i32 = arith.constant 0 : i32
    %c0_i32_0 = arith.constant 0 : i32
    %c0_i32_1 = arith.constant 0 : i32
    return %arg0, %c0_i32, %c0_i32_0 : i32, i32, i32
  }
  func.func @transform_12(%arg0: i32) -> (i32, i32, i32) {
    %c0_i32 = arith.constant 0 : i32
    %c0_i32_0 = arith.constant 0 : i32
    %c0_i32_1 = arith.constant 0 : i32
    return %arg0, %c0_i32, %c0_i32_0 : i32, i32, i32
  }
  func.func @transform_13(%arg0: i32) -> (i32, i32, i32) {
    %c0_i32 = arith.constant 0 : i32
    %c0_i32_0 = arith.constant 0 : i32
    %c0_i32_1 = arith.constant 0 : i32
    return %arg0, %c0_i32, %c0_i32_0 : i32, i32, i32
  }
  func.func @transform_14(%arg0: i32) -> (i32, i32, i32) {
    %c0_i32 = arith.constant 0 : i32
    %c0_i32_0 = arith.constant 0 : i32
    %c0_i32_1 = arith.constant 0 : i32
    return %arg0, %c0_i32, %c0_i32_0 : i32, i32, i32
  }
  func.func @transform_15(%arg0: i32) -> (i32, i32) {
    %c0_i32 = arith.constant 0 : i32
    %c0_i32_0 = arith.constant 0 : i32
    %c0_i32_1 = arith.constant 0 : i32
    return %c0_i32, %c0_i32_0 : i32, i32
  }
  func.func @transform_16(%arg0: i32) -> (i32, i32) {
    %c0_i32 = arith.constant 0 : i32
    %c0_i32_0 = arith.constant 0 : i32
    %c0_i32_1 = arith.constant 0 : i32
    return %c0_i32, %c0_i32_0 : i32, i32
  }
  func.func @transform_17(%arg0: i32) -> (i32, i32) {
    %c0_i32 = arith.constant 0 : i32
    %c0_i32_0 = arith.constant 0 : i32
    %c0_i32_1 = arith.constant 0 : i32
    return %c0_i32, %c0_i32_0 : i32, i32
  }
}

</mosaic_0001>

<llo_original>
// kernel: tpu_custom_call.1
$region0: #{tpu_custom_call.1}
  #allocation0 [shape = 'u32[]', space=smem, size = 0x4, offset = 0x4, fixed_abs, tag = 'smem constant byte address 0x4 - core index']
  #allocation1 [shape = 'u32[144,128]{1,0:T(1,128)}', space=vmem, size = 0x12000, scoped, tag = 'internal scratch']
  #allocation2 [shape = 'f32[16,32]{1,0:T(8,128)}', space=vmem, size = 0x2000, scoped, tag = 'scratch operand']
  %s0 = inlined_call_operand.vmem [shape: bf16[16,16], index: 0, kind: input, shape index: {}]
  %s1 = inlined_call_operand.vmem [shape: bf16[16,32], index: 1, kind: input, shape index: {}]
  %s2 = inlined_call_operand.vmem [shape: f32[1,32], index: 2, kind: input, shape index: {}]
  %s3 = inlined_call_operand.vmem [shape: bf16[2,32,96], index: 3, kind: input, shape index: {}]
  %s4 = inlined_call_operand.vmem [shape: f32[2,1,96], index: 4, kind: input, shape index: {}]
  %s5 = inlined_call_operand.vmem [shape: bf16[2,4,8,32], index: 5, kind: input, shape index: {}]
  %s6 = inlined_call_operand.vmem [shape: f32[2,1,32], index: 6, kind: input, shape index: {}]
  %s7 = inlined_call_operand.vmem [shape: f32[2,1,32], index: 7, kind: input, shape index: {}]
  %s8 = inlined_call_operand.vmem [shape: f32[2,1,32], index: 8, kind: input, shape index: {}]
  %s9 = inlined_call_operand.vmem [shape: f32[2,1,32], index: 9, kind: input, shape index: {}]
  %s10 = inlined_call_operand.vmem [shape: f32[2,1,32], index: 10, kind: input, shape index: {}]
  %s11 = inlined_call_operand.vmem [shape: bf16[2,32,128], index: 11, kind: input, shape index: {}]
  %s12 = inlined_call_operand.vmem [shape: f32[2,1,128], index: 12, kind: input, shape index: {}]
  %s13 = inlined_call_operand.vmem [shape: bf16[2,128,32], index: 13, kind: input, shape index: {}]
  %s14 = inlined_call_operand.vmem [shape: f32[2,1,32], index: 14, kind: input, shape index: {}]
  %s15 = inlined_call_operand.vmem [shape: bf16[32,128], index: 15, kind: input, shape index: {}]
  %s16 = inlined_call_operand.vmem [shape: f32[1,128], index: 16, kind: input, shape index: {}]
  %s17 = inlined_call_operand.hbm [shape: f32[2,128], index: 17, kind: output, shape index: {}]
  %s18 = sld [smem:[#allocation0]]
  $region109: #{tpu_custom_call.1} parent=0
    _
  %s20 = ssub.s32 1, %s18
  %s21 = scalar_select 0, %s20, %s18
  $region1: #{tpu_custom_call.1} parent=0
    #allocation3 [shape = 'u8[1024]{0}', space=vmem, size = 0x400, scoped, tag = 'output window, operand 0, single buffered']
    #allocation4 [shape = 's32[2]{0}', space=sflag, size = 0x8, scoped, tag = 'scoped memory for tpu_custom_call.1']
    %22 = vsyncpa [#allocation4], 0
    loop: start=0, step=1, limit=4
    $region2: #{tpu_custom_call.1} parent=1 // loop_pre_header
      _
    $region3: #{tpu_custom_call.1} parent=1 // loop_header
      %s24 = sphi 0, %s28
      %p25 = scmp.ge.s32.totalorder %s24, 4
      %s32 = sphi 0, %s32
      %s34 = sphi 0, %s32
      %s35 = sphi 0, %s34
      %s49 = sphi 0, %s35
      %s53 = sphi 0, %s53
      %s55 = sphi 0, %s53
      %s56 = sphi 0, %s55
      %s70 = sphi 0, %s56
      %s74 = sphi 0, %s74
      %s76 = sphi 0, %s74
      %s77 = sphi 0, %s76
      %s91 = sphi 0, %s77
      %s97 = sphi 0, %s99
      %s100 = sphi 0, %s97
      %s101 = sphi 0, %s100
      %s117 = sphi 0, %s101
      %s123 = sphi 0, %s125
      %s126 = sphi 0, %s123
      %s127 = sphi 0, %s126
      %s143 = sphi 0, %s127
      %s149 = sphi 0, %s151
      %s152 = sphi 0, %s149
      %s153 = sphi 0, %s152
      %s169 = sphi 0, %s153
      %s175 = sphi 0, %s177
      %s178 = sphi 0, %s175
      %s179 = sphi 0, %s178
      %s195 = sphi 0, %s179
      %s201 = sphi 0, %s203
      %s204 = sphi 0, %s201
      %s205 = sphi 0, %s204
      %s221 = sphi 0, %s205
      %s227 = sphi 0, %s229
      %s230 = sphi 0, %s227
      %s231 = sphi 0, %s230
      %s247 = sphi 0, %s231
      %s253 = sphi 0, %s255
      %s256 = sphi 0, %s253
      %s257 = sphi 0, %s256
      %s273 = sphi 0, %s257
      %s279 = sphi 0, %s281
      %s282 = sphi 0, %s279
      %s283 = sphi 0, %s282
      %s299 = sphi 0, %s283
      %s305 = sphi 0, %s307
      %s308 = sphi 0, %s305
      %s309 = sphi 0, %s308
      %s325 = sphi 0, %s309
      %s331 = sphi 0, %s333
      %s334 = sphi 0, %s331
      %s335 = sphi 0, %s334
      %s351 = sphi 0, %s335
      %s357 = sphi 0, %s359
      %s360 = sphi 0, %s357
      %s361 = sphi 0, %s360
      %s377 = sphi 0, %s361
      %s383 = sphi 0, %s385
      %s386 = sphi 0, %s383
      %s387 = sphi 0, %s386
      %s403 = sphi 0, %s387
      %s407 = sphi 0, %s407
      %s409 = sphi 0, %s407
      %s410 = sphi 0, %s409
      %s424 = sphi 0, %s410
      %s428 = sphi 0, %s428
      %s430 = sphi 0, %s428
      %s431 = sphi 0, %s430
      %s445 = sphi 0, %s431
      %s449 = sphi 0, %s449
      %s451 = sphi 0, %s449
      %s452 = sphi 0, %s451
      %s466 = sphi 0, %s452
    $region4: #{tpu_custom_call.1} parent=1 // loop_header_branch
      %27 = sbr.rel (%p25) target = $region8
    $region5: #{tpu_custom_call.1} parent=1 // loop_body
      %s29 = ssub.s32 %s24, 1
      %s30 = ssub.s32 %s24, 2
      %s31 = sadd.s32 %s24, 1
      %s33 = sadd.s32 %s32, 1
      %p36 = scmp.eq.s32.totalorder %s24, 1
      %p37 = scmp.ne.s32.totalorder %s32, %s34
      %p38 = scmp.eq.s32.totalorder %s24, 0
      %p39 = por %p37, %p38
      %p40 = scmp.ne.s32.totalorder %s32, %s34
      %p41 = scmp.eq.s32.totalorder %s29, 1
      %p42 = por %p40, %p41
      %p43 = scmp.ne.s32.totalorder %s34, %s35
      %p44 = scmp.eq.s32.totalorder %s29, 0
      %p45 = por %p43, %p44
      %p46 = scmp.ne.s32.totalorder %s34, %s35
      %p47 = scmp.eq.s32.totalorder %s30, 1
      %p48 = por %p46, %p47
      %p50 = scmp.ne.s32.totalorder %s35, %s49
      %p51 = scmp.eq.s32.totalorder %s30, 0
      %p52 = por %p50, %p51
      %s54 = sadd.s32 %s53, 1
      %p57 = scmp.eq.s32.totalorder %s24, 1
      %p58 = scmp.ne.s32.totalorder %s53, %s55
      %p59 = scmp.eq.s32.totalorder %s24, 0
      %p60 = por %p58, %p59
      %p61 = scmp.ne.s32.totalorder %s53, %s55
      %p62 = scmp.eq.s32.totalorder %s29, 1
      %p63 = por %p61, %p62
      %p64 = scmp.ne.s32.totalorder %s55, %s56
      %p65 = scmp.eq.s32.totalorder %s29, 0
      %p66 = por %p64, %p65
      %p67 = scmp.ne.s32.totalorder %s55, %s56
      %p68 = scmp.eq.s32.totalorder %s30, 1
      %p69 = por %p67, %p68
      %p71 = scmp.ne.s32.totalorder %s56, %s70
      %p72 = scmp.eq.s32.totalorder %s30, 0
      %p73 = por %p71, %p72
      %s75 = sadd.s32 %s74, 1
      %p78 = scmp.eq.s32.totalorder %s24, 1
      %p79 = scmp.ne.s32.totalorder %s74, %s76
      %p80 = scmp.eq.s32.totalorder %s24, 0
      %p81 = por %p79, %p80
      %p82 = scmp.ne.s32.totalorder %s74, %s76
      %p83 = scmp.eq.s32.totalorder %s29, 1
      %p84 = por %p82, %p83
      %p85 = scmp.ne.s32.totalorder %s76, %s77
      %p86 = scmp.eq.s32.totalorder %s29, 0
      %p87 = por %p85, %p86
      %p88 = scmp.ne.s32.totalorder %s76, %s77
      %p89 = scmp.eq.s32.totalorder %s30, 1
      %p90 = por %p88, %p89
      %p92 = scmp.ne.s32.totalorder %s77, %s91
      %p93 = scmp.eq.s32.totalorder %s30, 0
      %p94 = por %p92, %p93
      %s95 = ssub.s32 %s24, %s31
      %p96 = scmp.eq.s32.totalorder %s95, 0
      %s98 = sadd.s32 %s97, 1
      %s99 = scalar_select %p96, %s97, %s98
      %p102 = pneg %p96
      %p103 = scmp.eq.s32.totalorder %s24, 1
      %p104 = por %p102, %p103
      %p105 = scmp.ne.s32.totalorder %s97, %s100
      %p106 = scmp.eq.s32.totalorder %s24, 0
      %p107 = por %p105, %p106
      %p108 = scmp.ne.s32.totalorder %s97, %s100
      %p109 = scmp.eq.s32.totalorder %s29, 1
      %p110 = por %p108, %p109
      %p111 = scmp.ne.s32.totalorder %s100, %s101
      %p112 = scmp.eq.s32.totalorder %s29, 0
      %p113 = por %p111, %p112
      %p114 = scmp.ne.s32.totalorder %s100, %s101
      %p115 = scmp.eq.s32.totalorder %s30, 1
      %p116 = por %p114, %p115
      %p118 = scmp.ne.s32.totalorder %s101, %s117
      %p119 = scmp.eq.s32.totalorder %s30, 0
      %p120 = por %p118, %p119
      %s121 = ssub.s32 %s24, %s31
      %p122 = scmp.eq.s32.totalorder %s121, 0
      %s124 = sadd.s32 %s123, 1
      %s125 = scalar_select %p122, %s123, %s124
      %p128 = pneg %p122
      %p129 = scmp.eq.s32.totalorder %s24, 1
      %p130 = por %p128, %p129
      %p131 = scmp.ne.s32.totalorder %s123, %s126
      %p132 = scmp.eq.s32.totalorder %s24, 0
      %p133 = por %p131, %p132
      %p134 = scmp.ne.s32.totalorder %s123, %s126
      %p135 = scmp.eq.s32.totalorder %s29, 1
      %p136 = por %p134, %p135
      %p137 = scmp.ne.s32.totalorder %s126, %s127
      %p138 = scmp.eq.s32.totalorder %s29, 0
      %p139 = por %p137, %p138
      %p140 = scmp.ne.s32.totalorder %s126, %s127
      %p141 = scmp.eq.s32.totalorder %s30, 1
      %p142 = por %p140, %p141
      %p144 = scmp.ne.s32.totalorder %s127, %s143
      %p145 = scmp.eq.s32.totalorder %s30, 0
      %p146 = por %p144, %p145
      %s147 = ssub.s32 %s24, %s31
      %p148 = scmp.eq.s32.totalorder %s147, 0
      %s150 = sadd.s32 %s149, 1
      %s151 = scalar_select %p148, %s149, %s150
      %p154 = pneg %p148
      %p155 = scmp.eq.s32.totalorder %s24, 1
      %p156 = por %p154, %p155
      %p157 = scmp.ne.s32.totalorder %s149, %s152
      %p158 = scmp.eq.s32.totalorder %s24, 0
      %p159 = por %p157, %p158
      %p160 = scmp.ne.s32.totalorder %s149, %s152
      %p161 = scmp.eq.s32.totalorder %s29, 1
      %p162 = por %p160, %p161
      %p163 = scmp.ne.s32.totalorder %s152, %s153
      %p164 = scmp.eq.s32.totalorder %s29, 0
      %p165 = por %p163, %p164
      %p166 = scmp.ne.s32.totalorder %s152, %s153
      %p167 = scmp.eq.s32.totalorder %s30, 1
      %p168 = por %p166, %p167
      %p170 = scmp.ne.s32.totalorder %s153, %s169
      %p171 = scmp.eq.s32.totalorder %s30, 0
      %p172 = por %p170, %p171
      %s173 = ssub.s32 %s24, %s31
      %p174 = scmp.eq.s32.totalorder %s173, 0
      %s176 = sadd.s32 %s175, 1
      %s177 = scalar_select %p174, %s175, %s176
      %p180 = pneg %p174
      %p181 = scmp.eq.s32.totalorder %s24, 1
      %p182 = por %p180, %p181
      %p183 = scmp.ne.s32.totalorder %s175, %s178
      %p184 = scmp.eq.s32.totalorder %s24, 0
      %p185 = por %p183, %p184
      %p186 = scmp.ne.s32.totalorder %s175, %s178
      %p187 = scmp.eq.s32.totalorder %s29, 1
      %p188 = por %p186, %p187
      %p189 = scmp.ne.s32.totalorder %s178, %s179
      %p190 = scmp.eq.s32.totalorder %s29, 0
      %p191 = por %p189, %p190
      %p192 = scmp.ne.s32.totalorder %s178, %s179
      %p193 = scmp.eq.s32.totalorder %s30, 1
      %p194 = por %p192, %p193
      %p196 = scmp.ne.s32.totalorder %s179, %s195
      %p197 = scmp.eq.s32.totalorder %s30, 0
      %p198 = por %p196, %p197
      %s199 = ssub.s32 %s24, %s31
      %p200 = scmp.eq.s32.totalorder %s199, 0
      %s202 = sadd.s32 %s201, 1
      %s203 = scalar_select %p200, %s201, %s202
      %p206 = pneg %p200
      %p207 = scmp.eq.s32.totalorder %s24, 1
      %p208 = por %p206, %p207
      %p209 = scmp.ne.s32.totalorder %s201, %s204
      %p210 = scmp.eq.s32.totalorder %s24, 0
      %p211 = por %p209, %p210
      %p212 = scmp.ne.s32.totalorder %s201, %s204
      %p213 = scmp.eq.s32.totalorder %s29, 1
      %p214 = por %p212, %p213
      %p215 = scmp.ne.s32.totalorder %s204, %s205
      %p216 = scmp.eq.s32.totalorder %s29, 0
      %p217 = por %p215, %p216
      %p218 = scmp.ne.s32.totalorder %s204, %s205
      %p219 = scmp.eq.s32.totalorder %s30, 1
      %p220 = por %p218, %p219
      %p222 = scmp.ne.s32.totalorder %s205, %s221
      %p223 = scmp.eq.s32.totalorder %s30, 0
      %p224 = por %p222, %p223
      %s225 = ssub.s32 %s24, %s31
      %p226 = scmp.eq.s32.totalorder %s225, 0
      %s228 = sadd.s32 %s227, 1
      %s229 = scalar_select %p226, %s227, %s228
      %p232 = pneg %p226
      %p233 = scmp.eq.s32.totalorder %s24, 1
      %p234 = por %p232, %p233
      %p235 = scmp.ne.s32.totalorder %s227, %s230
      %p236 = scmp.eq.s32.totalorder %s24, 0
      %p237 = por %p235, %p236
      %p238 = scmp.ne.s32.totalorder %s227, %s230
      %p239 = scmp.eq.s32.totalorder %s29, 1
      %p240 = por %p238, %p239
      %p241 = scmp.ne.s32.totalorder %s230, %s231
      %p242 = scmp.eq.s32.totalorder %s29, 0
      %p243 = por %p241, %p242
      %p244 = scmp.ne.s32.totalorder %s230, %s231
      %p245 = scmp.eq.s32.totalorder %s30, 1
      %p246 = por %p244, %p245
      %p248 = scmp.ne.s32.totalorder %s231, %s247
      %p249 = scmp.eq.s32.totalorder %s30, 0
      %p250 = por %p248, %p249
      %s251 = ssub.s32 %s24, %s31
      %p252 = scmp.eq.s32.totalorder %s251, 0
      %s254 = sadd.s32 %s253, 1
      %s255 = scalar_select %p252, %s253, %s254
      %p258 = pneg %p252
      %p259 = scmp.eq.s32.totalorder %s24, 1
      %p260 = por %p258, %p259
      %p261 = scmp.ne.s32.totalorder %s253, %s256
      %p262 = scmp.eq.s32.totalorder %s24, 0
      %p263 = por %p261, %p262
      %p264 = scmp.ne.s32.totalorder %s253, %s256
      %p265 = scmp.eq.s32.totalorder %s29, 1
      %p266 = por %p264, %p265
      %p267 = scmp.ne.s32.totalorder %s256, %s257
      %p268 = scmp.eq.s32.totalorder %s29, 0
      %p269 = por %p267, %p268
      %p270 = scmp.ne.s32.totalorder %s256, %s257
      %p271 = scmp.eq.s32.totalorder %s30, 1
      %p272 = por %p270, %p271
      %p274 = scmp.ne.s32.totalorder %s257, %s273
      %p275 = scmp.eq.s32.totalorder %s30, 0
      %p276 = por %p274, %p275
      %s277 = ssub.s32 %s24, %s31
      %p278 = scmp.eq.s32.totalorder %s277, 0
      %s280 = sadd.s32 %s279, 1
      %s281 = scalar_select %p278, %s279, %s280
      %p284 = pneg %p278
      %p285 = scmp.eq.s32.totalorder %s24, 1
      %p286 = por %p284, %p285
      %p287 = scmp.ne.s32.totalorder %s279, %s282
      %p288 = scmp.eq.s32.totalorder %s24, 0
      %p289 = por %p287, %p288
      %p290 = scmp.ne.s32.totalorder %s279, %s282
      %p291 = scmp.eq.s32.totalorder %s29, 1
      %p292 = por %p290, %p291
      %p293 = scmp.ne.s32.totalorder %s282, %s283
      %p294 = scmp.eq.s32.totalorder %s29, 0
      %p295 = por %p293, %p294
      %p296 = scmp.ne.s32.totalorder %s282, %s283
      %p297 = scmp.eq.s32.totalorder %s30, 1
      %p298 = por %p296, %p297
      %p300 = scmp.ne.s32.totalorder %s283, %s299
      %p301 = scmp.eq.s32.totalorder %s30, 0
      %p302 = por %p300, %p301
      %s303 = ssub.s32 %s24, %s31
      %p304 = scmp.eq.s32.totalorder %s303, 0
      %s306 = sadd.s32 %s305, 1
      %s307 = scalar_select %p304, %s305, %s306
      %p310 = pneg %p304
      %p311 = scmp.eq.s32.totalorder %s24, 1
      %p312 = por %p310, %p311
      %p313 = scmp.ne.s32.totalorder %s305, %s308
      %p314 = scmp.eq.s32.totalorder %s24, 0
      %p315 = por %p313, %p314
      %p316 = scmp.ne.s32.totalorder %s305, %s308
      %p317 = scmp.eq.s32.totalorder %s29, 1
      %p318 = por %p316, %p317
      %p319 = scmp.ne.s32.totalorder %s308, %s309
      %p320 = scmp.eq.s32.totalorder %s29, 0
      %p321 = por %p319, %p320
      %p322 = scmp.ne.s32.totalorder %s308, %s309
      %p323 = scmp.eq.s32.totalorder %s30, 1
      %p324 = por %p322, %p323
      %p326 = scmp.ne.s32.totalorder %s309, %s325
      %p327 = scmp.eq.s32.totalorder %s30, 0
      %p328 = por %p326, %p327
      %s329 = ssub.s32 %s24, %s31
      %p330 = scmp.eq.s32.totalorder %s329, 0
      %s332 = sadd.s32 %s331, 1
      %s333 = scalar_select %p330, %s331, %s332
      %p336 = pneg %p330
      %p337 = scmp.eq.s32.totalorder %s24, 1
      %p338 = por %p336, %p337
      %p339 = scmp.ne.s32.totalorder %s331, %s334
      %p340 = scmp.eq.s32.totalorder %s24, 0
      %p341 = por %p339, %p340
      %p342 = scmp.ne.s32.totalorder %s331, %s334
      %p343 = scmp.eq.s32.totalorder %s29, 1
      %p344 = por %p342, %p343
      %p345 = scmp.ne.s32.totalorder %s334, %s335
      %p346 = scmp.eq.s32.totalorder %s29, 0
      %p347 = por %p345, %p346
      %p348 = scmp.ne.s32.totalorder %s334, %s335
      %p349 = scmp.eq.s32.totalorder %s30, 1
      %p350 = por %p348, %p349
      %p352 = scmp.ne.s32.totalorder %s335, %s351
      %p353 = scmp.eq.s32.totalorder %s30, 0
      %p354 = por %p352, %p353
      %s355 = ssub.s32 %s24, %s31
      %p356 = scmp.eq.s32.totalorder %s355, 0
      %s358 = sadd.s32 %s357, 1
      %s359 = scalar_select %p356, %s357, %s358
      %p362 = pneg %p356
      %p363 = scmp.eq.s32.totalorder %s24, 1
      %p364 = por %p362, %p363
      %p365 = scmp.ne.s32.totalorder %s357, %s360
      %p366 = scmp.eq.s32.totalorder %s24, 0
      %p367 = por %p365, %p366
      %p368 = scmp.ne.s32.totalorder %s357, %s360
      %p369 = scmp.eq.s32.totalorder %s29, 1
      %p370 = por %p368, %p369
      %p371 = scmp.ne.s32.totalorder %s360, %s361
      %p372 = scmp.eq.s32.totalorder %s29, 0
      %p373 = por %p371, %p372
      %p374 = scmp.ne.s32.totalorder %s360, %s361
      %p375 = scmp.eq.s32.totalorder %s30, 1
      %p376 = por %p374, %p375
      %p378 = scmp.ne.s32.totalorder %s361, %s377
      %p379 = scmp.eq.s32.totalorder %s30, 0
      %p380 = por %p378, %p379
      %s381 = ssub.s32 %s24, %s31
      %p382 = scmp.eq.s32.totalorder %s381, 0
      %s384 = sadd.s32 %s383, 1
      %s385 = scalar_select %p382, %s383, %s384
      %p388 = pneg %p382
      %p389 = scmp.eq.s32.totalorder %s24, 1
      %p390 = por %p388, %p389
      %p391 = scmp.ne.s32.totalorder %s383, %s386
      %p392 = scmp.eq.s32.totalorder %s24, 0
      %p393 = por %p391, %p392
      %p394 = scmp.ne.s32.totalorder %s383, %s386
      %p395 = scmp.eq.s32.totalorder %s29, 1
      %p396 = por %p394, %p395
      %p397 = scmp.ne.s32.totalorder %s386, %s387
      %p398 = scmp.eq.s32.totalorder %s29, 0
      %p399 = por %p397, %p398
      %p400 = scmp.ne.s32.totalorder %s386, %s387
      %p401 = scmp.eq.s32.totalorder %s30, 1
      %p402 = por %p400, %p401
      %p404 = scmp.ne.s32.totalorder %s387, %s403
      %p405 = scmp.eq.s32.totalorder %s30, 0
      %p406 = por %p404, %p405
      %s408 = sadd.s32 %s407, 1
      %p411 = scmp.eq.s32.totalorder %s24, 1
      %p412 = scmp.ne.s32.totalorder %s407, %s409
      %p413 = scmp.eq.s32.totalorder %s24, 0
      %p414 = por %p412, %p413
      %p415 = scmp.ne.s32.totalorder %s407, %s409
      %p416 = scmp.eq.s32.totalorder %s29, 1
      %p417 = por %p415, %p416
      %p418 = scmp.ne.s32.totalorder %s409, %s410
      %p419 = scmp.eq.s32.totalorder %s29, 0
      %p420 = por %p418, %p419
      %p421 = scmp.ne.s32.totalorder %s409, %s410
      %p422 = scmp.eq.s32.totalorder %s30, 1
      %p423 = por %p421, %p422
      %p425 = scmp.ne.s32.totalorder %s410, %s424
      %p426 = scmp.eq.s32.totalorder %s30, 0
      %p427 = por %p425, %p426
      %s429 = sadd.s32 %s428, 1
      %p432 = scmp.eq.s32.totalorder %s24, 1
      %p433 = scmp.ne.s32.totalorder %s428, %s430
      %p434 = scmp.eq.s32.totalorder %s24, 0
      %p435 = por %p433, %p434
      %p436 = scmp.ne.s32.totalorder %s428, %s430
      %p437 = scmp.eq.s32.totalorder %s29, 1
      %p438 = por %p436, %p437
      %p439 = scmp.ne.s32.totalorder %s430, %s431
      %p440 = scmp.eq.s32.totalorder %s29, 0
      %p441 = por %p439, %p440
      %p442 = scmp.ne.s32.totalorder %s430, %s431
      %p443 = scmp.eq.s32.totalorder %s30, 1
      %p444 = por %p442, %p443
      %p446 = scmp.ne.s32.totalorder %s431, %s445
      %p447 = scmp.eq.s32.totalorder %s30, 0
      %p448 = por %p446, %p447
      %s450 = sadd.s32 %s449, 1
      %p453 = scmp.eq.s32.totalorder %s24, 1
      %p454 = scmp.ne.s32.totalorder %s449, %s451
      %p455 = scmp.eq.s32.totalorder %s24, 0
      %p456 = por %p454, %p455
      %p457 = scmp.ne.s32.totalorder %s449, %s451
      %p458 = scmp.eq.s32.totalorder %s29, 1
      %p459 = por %p457, %p458
      %p460 = scmp.ne.s32.totalorder %s451, %s452
      %p461 = scmp.eq.s32.totalorder %s29, 0
      %p462 = por %p460, %p461
      %p463 = scmp.ne.s32.totalorder %s451, %s452
      %p464 = scmp.eq.s32.totalorder %s30, 1
      %p465 = por %p463, %p464
      %p467 = scmp.ne.s32.totalorder %s452, %s466
      %p468 = scmp.eq.s32.totalorder %s30, 0
      %p469 = por %p467, %p468
      %p470 = scmp.le.s32.totalorder 1, %s24
      %p471 = scmp.lt.s32.totalorder %s24, 3
      %p472 = pnand %p470, %p471
      %p473 = pneg %p472
      // Predicated region
      $region9: #{tpu_custom_call.1} parent=5 // pred_check
        _
      $region10: #{tpu_custom_call.1} parent=5 // pred_check_branch
        %475 = sbr.rel (%p472) target = $region12
      $region11: #{tpu_custom_call.1} parent=5 // pred_region
        %s476 = ssub.s32 %s24, 1
        // Predicated region
        $region13: #{tpu_custom_call.1} parent=11 // pred_check
          %p477 = pneg %p45
        $region14: #{tpu_custom_call.1} parent=11 // pred_check_branch
          %479 = sbr.rel (%p477) target = $region16
        $region15: #{tpu_custom_call.1} parent=11 // pred_region
          _
        $region16: #{tpu_custom_call.1} parent=11 // pred_fallthru
          _
        // Predicated region
        $region17: #{tpu_custom_call.1} parent=11 // pred_check
          %p480 = pneg %p66
        $region18: #{tpu_custom_call.1} parent=11 // pred_check_branch
          %482 = sbr.rel (%p480) target = $region20
        $region19: #{tpu_custom_call.1} parent=11 // pred_region
          _
        $region20: #{tpu_custom_call.1} parent=11 // pred_fallthru
          _
        // Predicated region
        $region21: #{tpu_custom_call.1} parent=11 // pred_check
          %p483 = pneg %p87
        $region22: #{tpu_custom_call.1} parent=11 // pred_check_branch
          %485 = sbr.rel (%p483) target = $region24
        $region23: #{tpu_custom_call.1} parent=11 // pred_region
          _
        $region24: #{tpu_custom_call.1} parent=11 // pred_fallthru
          _
        // Predicated region
        $region25: #{tpu_custom_call.1} parent=11 // pred_check
          %p486 = pneg %p420
        $region26: #{tpu_custom_call.1} parent=11 // pred_check_branch
          %488 = sbr.rel (%p486) target = $region28
        $region27: #{tpu_custom_call.1} parent=11 // pred_region
          _
        $region28: #{tpu_custom_call.1} parent=11 // pred_fallthru
          _
        // Predicated region
        $region29: #{tpu_custom_call.1} parent=11 // pred_check
          %p489 = pneg %p441
        $region30: #{tpu_custom_call.1} parent=11 // pred_check_branch
          %491 = sbr.rel (%p489) target = $region32
        $region31: #{tpu_custom_call.1} parent=11 // pred_region
          _
        $region32: #{tpu_custom_call.1} parent=11 // pred_fallthru
          _
      $region12: #{tpu_custom_call.1} parent=5 // pred_fallthru
        _
      %p492 = scmp.lt.s32.totalorder %s24, 2
      // Predicated region
      $region33: #{tpu_custom_call.1} parent=5 // pred_check
        %p493 = pneg %p492
      $region34: #{tpu_custom_call.1} parent=5 // pred_check_branch
        %495 = sbr.rel (%p493) target = $region36
      $region35: #{tpu_custom_call.1} parent=5 // pred_region
        // Predicated region
        $region37: #{tpu_custom_call.1} parent=35 // pred_check
          %p496 = pneg %p107
        $region38: #{tpu_custom_call.1} parent=35 // pred_check_branch
          %498 = sbr.rel (%p496) target = $region40
        $region39: #{tpu_custom_call.1} parent=35 // pred_region
          %p499 = scmp.lt.s32.totalorder %s24, 1
          %s500 = scalar_select %p499, %s24, 1
          %s501 = smul.addr %s500, 4
          %s502 = smul.addr %s501, 4
          %s503 = scalar_lea.vmem %s3, %s502
        $region40: #{tpu_custom_call.1} parent=35 // pred_fallthru
          _
        // Predicated region
        $region41: #{tpu_custom_call.1} parent=35 // pred_check
          %p504 = pneg %p133
        $region42: #{tpu_custom_call.1} parent=35 // pred_check_branch
          %506 = sbr.rel (%p504) target = $region44
        $region43: #{tpu_custom_call.1} parent=35 // pred_region
          %p507 = scmp.lt.s32.totalorder %s24, 1
          %s508 = scalar_select %p507, %s24, 1
          %s509 = scalar_lea.vmem %s4, %s508
        $region44: #{tpu_custom_call.1} parent=35 // pred_fallthru
          _
        // Predicated region
        $region45: #{tpu_custom_call.1} parent=35 // pred_check
          %p510 = pneg %p159
        $region46: #{tpu_custom_call.1} parent=35 // pred_check_branch
          %512 = sbr.rel (%p510) target = $region48
        $region47: #{tpu_custom_call.1} parent=35 // pred_region
          %p513 = scmp.lt.s32.totalorder %s24, 1
          %s514 = scalar_select %p513, %s24, 1
          %s515 = smul.addr %s514, 4
          %s516 = smul.addr %s515, 4
          %s517 = scalar_lea.vmem %s5, %s516
        $region48: #{tpu_custom_call.1} parent=35 // pred_fallthru
          _
        // Predicated region
        $region49: #{tpu_custom_call.1} parent=35 // pred_check
          %p518 = pneg %p185
        $region50: #{tpu_custom_call.1} parent=35 // pred_check_branch
          %520 = sbr.rel (%p518) target = $region52
        $region51: #{tpu_custom_call.1} parent=35 // pred_region
          %p521 = scmp.lt.s32.totalorder %s24, 1
          %s522 = scalar_select %p521, %s24, 1
          %s523 = scalar_lea.vmem %s6, %s522
        $region52: #{tpu_custom_call.1} parent=35 // pred_fallthru
          _
        // Predicated region
        $region53: #{tpu_custom_call.1} parent=35 // pred_check
          %p524 = pneg %p211
        $region54: #{tpu_custom_call.1} parent=35 // pred_check_branch
          %526 = sbr.rel (%p524) target = $region56
        $region55: #{tpu_custom_call.1} parent=35 // pred_region
          %p527 = scmp.lt.s32.totalorder %s24, 1
          %s528 = scalar_select %p527, %s24, 1
          %s529 = scalar_lea.vmem %s7, %s528
        $region56: #{tpu_custom_call.1} parent=35 // pred_fallthru
          _
        // Predicated region
        $region57: #{tpu_custom_call.1} parent=35 // pred_check
          %p530 = pneg %p237
        $region58: #{tpu_custom_call.1} parent=35 // pred_check_branch
          %532 = sbr.rel (%p530) target = $region60
        $region59: #{tpu_custom_call.1} parent=35 // pred_region
          %p533 = scmp.lt.s32.totalorder %s24, 1
          %s534 = scalar_select %p533, %s24, 1
          %s535 = scalar_lea.vmem %s8, %s534
        $region60: #{tpu_custom_call.1} parent=35 // pred_fallthru
          _
        // Predicated region
        $region61: #{tpu_custom_call.1} parent=35 // pred_check
          %p536 = pneg %p263
        $region62: #{tpu_custom_call.1} parent=35 // pred_check_branch
          %538 = sbr.rel (%p536) target = $region64
        $region63: #{tpu_custom_call.1} parent=35 // pred_region
          %p539 = scmp.lt.s32.totalorder %s24, 1
          %s540 = scalar_select %p539, %s24, 1
          %s541 = scalar_lea.vmem %s9, %s540
        $region64: #{tpu_custom_call.1} parent=35 // pred_fallthru
          _
        // Predicated region
        $region65: #{tpu_custom_call.1} parent=35 // pred_check
          %p542 = pneg %p289
        $region66: #{tpu_custom_call.1} parent=35 // pred_check_branch
          %544 = sbr.rel (%p542) target = $region68
        $region67: #{tpu_custom_call.1} parent=35 // pred_region
          %p545 = scmp.lt.s32.totalorder %s24, 1
          %s546 = scalar_select %p545, %s24, 1
          %s547 = scalar_lea.vmem %s10, %s546
        $region68: #{tpu_custom_call.1} parent=35 // pred_fallthru
          _
        // Predicated region
        $region69: #{tpu_custom_call.1} parent=35 // pred_check
          %p548 = pneg %p315
        $region70: #{tpu_custom_call.1} parent=35 // pred_check_branch
          %550 = sbr.rel (%p548) target = $region72
        $region71: #{tpu_custom_call.1} parent=35 // pred_region
          %p551 = scmp.lt.s32.totalorder %s24, 1
          %s552 = scalar_select %p551, %s24, 1
          %s553 = smul.addr %s552, 4
          %s554 = smul.addr %s553, 4
          %s555 = scalar_lea.vmem %s11, %s554
        $region72: #{tpu_custom_call.1} parent=35 // pred_fallthru
          _
        // Predicated region
        $region73: #{tpu_custom_call.1} parent=35 // pred_check
          %p556 = pneg %p341
        $region74: #{tpu_custom_call.1} parent=35 // pred_check_branch
          %558 = sbr.rel (%p556) target = $region76
        $region75: #{tpu_custom_call.1} parent=35 // pred_region
          %p559 = scmp.lt.s32.totalorder %s24, 1
          %s560 = scalar_select %p559, %s24, 1
          %s561 = scalar_lea.vmem %s12, %s560
        $region76: #{tpu_custom_call.1} parent=35 // pred_fallthru
          _
        // Predicated region
        $region77: #{tpu_custom_call.1} parent=35 // pred_check
          %p562 = pneg %p367
        $region78: #{tpu_custom_call.1} parent=35 // pred_check_branch
          %564 = sbr.rel (%p562) target = $region80
        $region79: #{tpu_custom_call.1} parent=35 // pred_region
          %p565 = scmp.lt.s32.totalorder %s24, 1
          %s566 = scalar_select %p565, %s24, 1
          %s567 = smul.addr %s566, 16
          %s568 = smul.addr %s567, 4
          %s569 = scalar_lea.vmem %s13, %s568
        $region80: #{tpu_custom_call.1} parent=35 // pred_fallthru
          _
        // Predicated region
        $region81: #{tpu_custom_call.1} parent=35 // pred_check
          %p570 = pneg %p393
        $region82: #{tpu_custom_call.1} parent=35 // pred_check_branch
          %572 = sbr.rel (%p570) target = $region84
        $region83: #{tpu_custom_call.1} parent=35 // pred_region
          %p573 = scmp.lt.s32.totalorder %s24, 1
          %s574 = scalar_select %p573, %s24, 1
          %s575 = scalar_lea.vmem %s14, %s574
        $region84: #{tpu_custom_call.1} parent=35 // pred_fallthru
          _
      $region36: #{tpu_custom_call.1} parent=5 // pred_fallthru
        _
      %p576 = scmp.le.s32.totalorder 1, %s24
      %p577 = scmp.lt.s32.totalorder %s24, 3
      %p578 = pnand %p576, %p577
      %p579 = pneg %p578
      // Predicated region
      $region85: #{tpu_custom_call.1} parent=5 // pred_check
        _
      $region86: #{tpu_custom_call.1} parent=5 // pred_check_branch
        %581 = sbr.rel (%p578) target = $region88
      $region87: #{tpu_custom_call.1} parent=5 // pred_region
        %s582 = ssub.s32 %s24, 1
        %p583 = pneg %p45
        %p584 = pneg %p42
        %p585 = pneg %p66
        %p586 = pneg %p63
        %p587 = pneg %p87
        %p588 = pneg %p84
        %p589 = scmp.lt.s32.totalorder %s29, 1
        %s590 = scalar_select %p589, %s29, 1
        %s591 = smul.addr %s590, 4
        %s592 = smul.addr %s591, 4
        %s593 = scalar_lea.vmem %s3, %s592
        %p594 = pneg %p113
        %p595 = pneg %p110
        %p596 = scmp.lt.s32.totalorder %s29, 1
        %s597 = scalar_select %p596, %s29, 1
        %s598 = scalar_lea.vmem %s4, %s597
        %p599 = pneg %p139
        %p600 = pneg %p136
        %p601 = scmp.lt.s32.totalorder %s29, 1
        %s602 = scalar_select %p601, %s29, 1
        %s603 = smul.addr %s602, 4
        %s604 = smul.addr %s603, 4
        %s605 = scalar_lea.vmem %s5, %s604
        %p606 = pneg %p165
        %p607 = pneg %p162
        %p608 = scmp.lt.s32.totalorder %s29, 1
        %s609 = scalar_select %p608, %s29, 1
        %s610 = scalar_lea.vmem %s6, %s609
        %p611 = pneg %p191
        %p612 = pneg %p188
        %p613 = scmp.lt.s32.totalorder %s29, 1
        %s614 = scalar_select %p613, %s29, 1
        %s615 = scalar_lea.vmem %s7, %s614
        %p616 = pneg %p217
        %p617 = pneg %p214
        %p618 = scmp.lt.s32.totalorder %s29, 1
        %s619 = scalar_select %p618, %s29, 1
        %s620 = scalar_lea.vmem %s8, %s619
        %p621 = pneg %p243
        %p622 = pneg %p240
        %p623 = scmp.lt.s32.totalorder %s29, 1
        %s624 = scalar_select %p623, %s29, 1
        %s625 = scalar_lea.vmem %s9, %s624
        %p626 = pneg %p269
        %p627 = pneg %p266
        %p628 = scmp.lt.s32.totalorder %s29, 1
        %s629 = scalar_select %p628, %s29, 1
        %s630 = scalar_lea.vmem %s10, %s629
        %p631 = pneg %p295
        %p632 = pneg %p292
        %p633 = scmp.lt.s32.totalorder %s29, 1
        %s634 = scalar_select %p633, %s29, 1
        %s635 = smul.addr %s634, 4
        %s636 = smul.addr %s635, 4
        %s637 = scalar_lea.vmem %s11, %s636
        %p638 = pneg %p321
        %p639 = pneg %p318
        %p640 = scmp.lt.s32.totalorder %s29, 1
        %s641 = scalar_select %p640, %s29, 1
        %s642 = scalar_lea.vmem %s12, %s641
        %p643 = pneg %p347
        %p644 = pneg %p344
        %p645 = scmp.lt.s32.totalorder %s29, 1
        %s646 = scalar_select %p645, %s29, 1
        %s647 = smul.addr %s646, 16
        %s648 = smul.addr %s647, 4
        %s649 = scalar_lea.vmem %s13, %s648
        %p650 = pneg %p373
        %p651 = pneg %p370
        %p652 = scmp.lt.s32.totalorder %s29, 1
        %s653 = scalar_select %p652, %s29, 1
        %s654 = scalar_lea.vmem %s14, %s653
        %p655 = pneg %p399
        %p656 = pneg %p396
        %p657 = pneg %p420
        %p658 = pneg %p417
        %p659 = pneg %p441
        %p660 = pneg %p438
        %p661 = pneg %p462
        %p662 = pneg %p459
        %p663 = scmp.lt.s32.totalorder %s29, 1
        %s664 = scalar_select %p663, %s29, 1
        %s665 = smul.addr %s664, 4
        %s666 = smul.addr %s665, 4
        %s667 = scalar_lea.vmem %s3, %s666
        %p668 = scmp.lt.s32.totalorder %s29, 1
        %s669 = scalar_select %p668, %s29, 1
        %s670 = scalar_lea.vmem %s4, %s669
        %p671 = scmp.lt.s32.totalorder %s29, 1
        %s672 = scalar_select %p671, %s29, 1
        %s673 = smul.addr %s672, 4
        %s674 = smul.addr %s673, 4
        %s675 = scalar_lea.vmem %s5, %s674
        %p676 = scmp.lt.s32.totalorder %s29, 1
        %s677 = scalar_select %p676, %s29, 1
        %s678 = scalar_lea.vmem %s6, %s677
        %p679 = scmp.lt.s32.totalorder %s29, 1
        %s680 = scalar_select %p679, %s29, 1
        %s681 = scalar_lea.vmem %s7, %s680
        %p682 = scmp.lt.s32.totalorder %s29, 1
        %s683 = scalar_select %p682, %s29, 1
        %s684 = scalar_lea.vmem %s8, %s683
        %p685 = scmp.lt.s32.totalorder %s29, 1
        %s686 = scalar_select %p685, %s29, 1
        %s687 = scalar_lea.vmem %s9, %s686
        %p688 = scmp.lt.s32.totalorder %s29, 1
        %s689 = scalar_select %p688, %s29, 1
        %s690 = scalar_lea.vmem %s10, %s689
        %p691 = scmp.lt.s32.totalorder %s29, 1
        %s692 = scalar_select %p691, %s29, 1
        %s693 = smul.addr %s692, 4
        %s694 = smul.addr %s693, 4
        %s695 = scalar_lea.vmem %s11, %s694
        %p696 = scmp.lt.s32.totalorder %s29, 1
        %s697 = scalar_select %p696, %s29, 1
        %s698 = scalar_lea.vmem %s12, %s697
        %p699 = scmp.lt.s32.totalorder %s29, 1
        %s700 = scalar_select %p699, %s29, 1
        %s701 = smul.addr %s700, 16
        %s702 = smul.addr %s701, 4
        %s703 = scalar_lea.vmem %s13, %s702
        %p704 = scmp.lt.s32.totalorder %s29, 1
        %s705 = scalar_select %p704, %s29, 1
        %s706 = scalar_lea.vmem %s14, %s705
        %p708 = scmp.eq.s32.totalorder %s29, 0
        // Predicated region
        $region89: #{tpu_custom_call.1} parent=87 // pred_check
          %p709 = pneg %p708
        $region90: #{tpu_custom_call.1} parent=87 // pred_check_branch
          %711 = sbr.rel (%p709) target = $region92
        $region91: #{tpu_custom_call.1} parent=87 // pred_region
          %v712 = vld [vmem:[%s0] sm:$0xf]
          %v713 = vld [vmem:[%s0 + $0x4] sm:$0xf]
          %v714 = vld [vmem:[%s1] sm:$0xf]
          %v715 = vld [vmem:[%s1 + $0x4] sm:$0xf]
          %v716 = vld [vmem:[%s2] sm:$0x1]
          %v718 = vlaneseq
          %v719 = vshrl.u32 %v718, 7
          %v720 = vsub.s32 0, %v719
          %v721 = vrot.slane %v716, %v720
          %v725 = vunpack.c.l.b16 %v712
          %v726 = vunpack.c.l.b16 %v713
          %v727 = vpack.c.b16 %v726, %v725
          %v730 = vunpack.c.l.b16 %v714
          %v731 = vunpack.c.l.b16 %v715
          %v732 = vpack.c.b16 %v731, %v730
          %vm734 = vcmask 130048
          %v736 = vsel %vm734, %v727, 0
          %738 = vmatprep.subr.bf16.mxu0 0
          %739 = vmatpush1.bf16.msra.mxu0 0
          %740 = vmatprep.subr.bf16.mxu0 0
          %741 = vmatpush1.bf16.msra.mxu0 0
          %742 = vmatprep.subr.bf16.mxu0 0
          %743 = vmatpush1.bf16.msra.mxu0 0
          %744 = vmatprep.subr.bf16.mxu0 0
          %745 = vmatpush1.bf16.msra.mxu0 0
          %746 = vmatprep.subr.bf16.mxu0 0
          %747 = vmatpush1.bf16.msra.mxu0 0
          %748 = vmatprep.subr.bf16.mxu0 0
          %749 = vmatpush1.bf16.msra.mxu0 0
          %750 = vmatprep.subr.bf16.mxu0 0
          %751 = vmatpush1.bf16.msra.mxu0 0
          %752 = vmatprep.subr.bf16.mxu0 0
          %753 = vmatpush1.bf16.msra.mxu0 %v732
          %754 = vmatprep.subr.bf16.mxu0 0
          %755 = vmatpush2.bf16.msra.mxu0 0
          %756 = vmatprep.subr.bf16.mxu0 0
          %757 = vmatpush2.bf16.msra.mxu0 0
          %758 = vmatprep.subr.bf16.mxu0 0
          %759 = vmatpush2.bf16.msra.mxu0 0
          %760 = vmatprep.subr.bf16.mxu0 0
          %761 = vmatpush2.bf16.msra.mxu0 0
          %762 = vmatprep.subr.bf16.mxu0 0
          %763 = vmatpush2.bf16.msra.mxu0 0
          %764 = vmatprep.subr.bf16.mxu0 0
          %765 = vmatpush2.bf16.msra.mxu0 0
          %766 = vmatprep.subr.bf16.mxu0 0
          %767 = vmatpush2.bf16.msra.mxu0 0
          %768 = vmatprep.subr.bf16.mxu0 0
          %769 = vmatpush2.bf16.msra.mxu0 0
          %770 = vmatprep.mubr.bf16.mxu0 0
          %771 = vmatmul.mubr.bf16.gmra.mxu0 %v736
          %v772 = vpop.f32.mrf.mxu0
          %v773 = vadd.f32 %v721, %v772
          %v774 = vpop.f32.mrf.mxu0
          %v775 = vpop.f32.mrf.mxu0
          %v776 = vadd.f32 %v721, %v775
          %v777 = vpop.f32.mrf.mxu0
          %778 = vdwg.mxu0
          %vm779 = vcmask 261120
          %780 = vst.msk [vmem:[#allocation2] sm:$0xff] %vm779, %v773
          %781 = vst.msk [vmem:[#allocation2 + $0x8] sm:$0xff] %vm779, %v776
        $region92: #{tpu_custom_call.1} parent=87 // pred_fallthru
          _
        %v782 = vld [vmem:[#allocation2] sm:$0xff]
        %v783 = vld [vmem:[#allocation2 + $0x8] sm:$0xff]
        %v784 = vpack.c.bf16 %v783, %v782
        %v785 = vld [vmem:[%s667] sm:$0xf]
        %v786 = vld [vmem:[%s667 + $0x4] sm:$0xf]
        %v787 = vld [vmem:[%s667 + $0x8] sm:$0xf]
        %v788 = vld [vmem:[%s667 + $0xc] sm:$0xf]
        %v789 = vld [vmem:[%s670] sm:$0x1]
        %v791 = vlaneseq
        %v792 = vshrl.u32 %v791, 7
        %v793 = vsub.s32 0, %v792
        %v794 = vrot.slane %v789, %v793
        %v800 = vunpack.c.l.b16 %v785
        %v801 = vunpack.c.l.b16 %v786
        %v802 = vunpack.c.l.b16 %v787
        %v803 = vunpack.c.l.b16 %v788
        %v804 = vpack.c.b16 %v801, %v800
        %v805 = vpack.c.b16 %v803, %v802
        %vm808 = vcmask 261120
        %v810 = vsel %vm808, %v784, 0
        %812 = vmatprep.subr.bf16.mxu0 0
        %813 = vmatpush1.bf16.msra.mxu0 0
        %814 = vmatprep.subr.bf16.mxu0 0
        %815 = vmatpush1.bf16.msra.mxu0 0
        %816 = vmatprep.subr.bf16.mxu0 0
        %817 = vmatpush1.bf16.msra.mxu0 0
        %818 = vmatprep.subr.bf16.mxu0 0
        %819 = vmatpush1.bf16.msra.mxu0 0
        %820 = vmatprep.subr.bf16.mxu0 0
        %821 = vmatpush1.bf16.msra.mxu0 0
        %822 = vmatprep.subr.bf16.mxu0 0
        %823 = vmatpush1.bf16.msra.mxu0 0
        %824 = vmatprep.subr.bf16.mxu0 0
        %825 = vmatpush1.bf16.msra.mxu0 %v805
        %826 = vmatprep.subr.bf16.mxu0 0
        %827 = vmatpush1.bf16.msra.mxu0 %v804
        %828 = vmatprep.subr.bf16.mxu0 0
        %829 = vmatpush2.bf16.msra.mxu0 0
        %830 = vmatprep.subr.bf16.mxu0 0
        %831 = vmatpush2.bf16.msra.mxu0 0
        %832 = vmatprep.subr.bf16.mxu0 0
        %833 = vmatpush2.bf16.msra.mxu0 0
        %834 = vmatprep.subr.bf16.mxu0 0
        %835 = vmatpush2.bf16.msra.mxu0 0
        %836 = vmatprep.subr.bf16.mxu0 0
        %837 = vmatpush2.bf16.msra.mxu0 0
        %838 = vmatprep.subr.bf16.mxu0 0
        %839 = vmatpush2.bf16.msra.mxu0 0
        %840 = vmatprep.subr.bf16.mxu0 0
        %841 = vmatpush2.bf16.msra.mxu0 0
        %842 = vmatprep.subr.bf16.mxu0 0
        %843 = vmatpush2.bf16.msra.mxu0 0
        %844 = vmatprep.mubr.bf16.mxu0 0
        %845 = vmatmul.mubr.bf16.gmra.mxu0 %v810
        %v846 = vpop.f32.mrf.mxu0
        %v847 = vadd.f32 %v794, %v846
        %v848 = vpop.f32.mrf.mxu0
        %v849 = vpop.f32.mrf.mxu0
        %v850 = vadd.f32 %v794, %v849
        %v851 = vpop.f32.mrf.mxu0
        %852 = vdwg.mxu0
        %v853 = vlaneseq
        %v854 = vshrl.u32 %v853, 7
        %v855 = vadd.s32 %v854, 8
        %vm856 = vcmp.lt.s32.totalorder %v854, 0
        %v857 = vsub.s32 0, %v854
        %v858 = vsel %vm856, %v857, %v854
        %v859 = vshrl.u32 %v858, 1
        %v860 = vand.u32 %v858, 1
        %v861 = vsub.s32 0, %v860
        %v862 = vsel %vm856, %v861, %v860
        %vm863 = vcmp.lt.s32.totalorder %v855, 0
        %v864 = vsub.s32 0, %v855
        %v865 = vsel %vm863, %v864, %v855
        %v866 = vshrl.u32 %v865, 1
        %v867 = vand.u32 %v865, 1
        %v868 = vsub.s32 0, %v867
        %v869 = vsel %vm863, %v868, %v867
        %vm870 = vcmp.ne.s32.totalorder %v862, 0
        %vm871 = vcmp.ne.s32.totalorder %v869, 0
        %vm872 = vcmp.lt.s32.totalorder %v862, 0
        %vm873 = vcmp.lt.s32.totalorder %v869, 0
        %vm874 = vmand %vm872, %vm870
        %vm875 = vmand %vm873, %vm871
        %v876 = vadd.s32 %v862, 2
        %v877 = vadd.s32 %v869, 2
        %v878 = vsel %vm874, %v876, %v862
        %v879 = vsel %vm875, %v877, %v869
        %v880 = vlaneseq
        %v881 = vand.u32 %v880, 127
        %vm882 = vcmp.lt.s32.totalorder %v881, 0
        %v883 = vsub.s32 0, %v881
        %v884 = vsel %vm882, %v883, %v881
        %v885 = vshrl.u32 %v884, 1
        %v886 = vand.u32 %v884, 1
        %v887 = vsub.s32 0, %v886
        %v888 = vsel %vm882, %v887, %v886
        %vm889 = vcmp.ne.s32.totalorder %v888, 0
        %vm890 = vcmp.lt.s32.totalorder %v888, 0
        %vm891 = vmand %vm890, %vm889
        %v892 = vadd.s32 %v888, 2
        %v893 = vsel %vm891, %v892, %v888
        %vm894 = vcmp.eq.s32.totalorder %v878, %v893
        %vm895 = vcmp.eq.s32.totalorder %v879, %v893
        %v896 = vpack.c.bf16 %v850, %v847
        %898 = vrot.lane.b32.xlu0 %v896, 96
        %v899 = vpop.permute.xlu0 %898
        %vm900 = vcmask 64512
        %v902 = vsel %vm900, %v896, 0
        %v905 = vsel %vm900, %v899, 0
        %907 = vmatprep.subr.bf16.mxu0 0
        %908 = vmatpush1.bf16.xpose.msra.mxu0 0
        %909 = vmatprep.subr.bf16.mxu0 0
        %910 = vmatpush1.bf16.xpose.msra.mxu0 0
        %911 = vmatprep.subr.bf16.mxu0 0
        %912 = vmatpush1.bf16.xpose.msra.mxu0 0
        %913 = vmatprep.subr.bf16.mxu0 0
        %914 = vmatpush1.bf16.xpose.msra.mxu0 0
        %915 = vmatprep.subr.bf16.mxu0 0
        %916 = vmatpush1.bf16.xpose.msra.mxu0 0
        %917 = vmatprep.subr.bf16.mxu0 0
        %918 = vmatpush1.bf16.xpose.msra.mxu0 0
        %919 = vmatprep.subr.bf16.mxu0 0
        %920 = vmatpush1.bf16.xpose.msra.mxu0 0
        %921 = vmatprep.subr.bf16.mxu0 0
        %922 = vmatpush1.bf16.xpose.msra.mxu0 %v905
        %923 = vmatprep.subr.bf16.mxu0 0
        %924 = vmatpush2.bf16.xpose.msra.mxu0 0
        %925 = vmatprep.subr.bf16.mxu0 0
        %926 = vmatpush2.bf16.xpose.msra.mxu0 0
        %927 = vmatprep.subr.bf16.mxu0 0
        %928 = vmatpush2.bf16.xpose.msra.mxu0 0
        %929 = vmatprep.subr.bf16.mxu0 0
        %930 = vmatpush2.bf16.xpose.msra.mxu0 0
        %931 = vmatprep.subr.bf16.mxu0 0
        %932 = vmatpush2.bf16.xpose.msra.mxu0 0
        %933 = vmatprep.subr.bf16.mxu0 0
        %934 = vmatpush2.bf16.xpose.msra.mxu0 0
        %935 = vmatprep.subr.bf16.mxu0 0
        %936 = vmatpush2.bf16.xpose.msra.mxu0 0
        %937 = vmatprep.subr.bf16.mxu0 0
        %938 = vmatpush2.bf16.xpose.msra.mxu0 0
        %939 = vmatprep.mubr.bf16.mxu0 0
        %940 = vmatmul.mubr.bf16.gmra.mxu0 %v902
        %v941 = vpop.f32.mrf.mxu0
        %v942 = vadd.f32 0.0, %v941
        %v943 = vpop.f32.mrf.mxu0
        %v944 = vpop.f32.mrf.mxu0
        %v945 = vadd.f32 0.0, %v944
        %v946 = vpop.f32.mrf.mxu0
        %947 = vdwg.mxu0
        %v948 = vmul.f32 %v942, 0.35355338
        %v949 = vmul.f32 %v945, 0.35355338
        %v950 = vsel %vm894, %v948, -1e+30
        %v951 = vsel %vm895, %v949, -1e+30
        %vm952 = vcmask 130048
        %v953 = vsel %vm952, %v950, -inf
        %954 = vmax.xlane.f32.xlu0 %v953
        %v955 = vpop.xlane.xlu0 %954
        %v956 = vsel %vm952, %v951, -inf
        %957 = vmax.xlane.f32.xlu0 %v956
        %v958 = vpop.xlane.xlu0 %957
        %v959 = vsub.f32 %v950, %v955
        %v960 = vsub.f32 %v951, %v958
        %v961 = vmul.f32 %v959, 1.442695
        %v962 = vpow.pop %v961
        %v963 = vmul.f32 %v960, 1.442695
        %v964 = vpow.pop %v963
        %v965 = vsel %vm952, %v962, 0.0
        %966 = vadd.xlane.f32.xlu0 %v965
        %v967 = vpop.xlane.xlu0 %966
        %v968 = vsel %vm952, %v964, 0.0
        %969 = vadd.xlane.f32.xlu0 %v968
        %v970 = vpop.xlane.xlu0 %969
        %v971 = vrcp.pop %v967
        %v972 = vrcp.pop %v970
        %v973 = vmul.f32 %v962, %v971
        %v974 = vmul.f32 %v964, %v972
        %v975 = vpack.c.bf16 %v974, %v973
        %976 = vrot.lane.b32.xlu0 %v896, 64
        %v977 = vpop.permute.xlu0 %976
        %v980 = vsel %vm952, %v975, 0
        %982 = vmatprep.subr.bf16.mxu0 0
        %983 = vmatpush1.bf16.msra.mxu0 0
        %984 = vmatprep.subr.bf16.mxu0 0
        %985 = vmatpush1.bf16.msra.mxu0 0
        %986 = vmatprep.subr.bf16.mxu0 0
        %987 = vmatpush1.bf16.msra.mxu0 0
        %988 = vmatprep.subr.bf16.mxu0 0
        %989 = vmatpush1.bf16.msra.mxu0 0
        %990 = vmatprep.subr.bf16.mxu0 0
        %991 = vmatpush1.bf16.msra.mxu0 0
        %992 = vmatprep.subr.bf16.mxu0 0
        %993 = vmatpush1.bf16.msra.mxu0 0
        %994 = vmatprep.subr.bf16.mxu0 0
        %995 = vmatpush1.bf16.msra.mxu0 0
        %996 = vmatprep.subr.bf16.mxu0 0
        %997 = vmatpush1.bf16.msra.mxu0 %v977
        %998 = vmatprep.subr.bf16.mxu0 0
        %999 = vmatpush2.bf16.msra.mxu0 0
        %1000 = vmatprep.subr.bf16.mxu0 0
        %1001 = vmatpush2.bf16.msra.mxu0 0
        %1002 = vmatprep.subr.bf16.mxu0 0
        %1003 = vmatpush2.bf16.msra.mxu0 0
        %1004 = vmatprep.subr.bf16.mxu0 0
        %1005 = vmatpush2.bf16.msra.mxu0 0
        %1006 = vmatprep.subr.bf16.mxu0 0
        %1007 = vmatpush2.bf16.msra.mxu0 0
        %1008 = vmatprep.subr.bf16.mxu0 0
        %1009 = vmatpush2.bf16.msra.mxu0 0
        %1010 = vmatprep.subr.bf16.mxu0 0
        %1011 = vmatpush2.bf16.msra.mxu0 0
        %1012 = vmatprep.subr.bf16.mxu0 0
        %1013 = vmatpush2.bf16.msra.mxu0 0
        %1014 = vmatprep.mubr.bf16.mxu0 0
        %1015 = vmatmul.mubr.bf16.gmra.mxu0 %v980
        %v1016 = vpop.f32.mrf.mxu0
        %v1017 = vadd.f32 0.0, %v1016
        %v1018 = vpop.f32.mrf.mxu0
        %v1019 = vpop.f32.mrf.mxu0
        %v1020 = vadd.f32 0.0, %v1019
        %v1021 = vpop.f32.mrf.mxu0
        %1022 = vdwg.mxu0
        %v1023 = vpack.c.bf16 %v1020, %v1017
        %v1024 = vld [vmem:[%s675] sm:$0xf]
        %1025 = vrot.lane.b32.xlu0 %v896, 120
        %v1026 = vpop.permute.xlu0 %1025
        %1027 = vrot.lane.b32.xlu0 %v896, 88
        %v1028 = vpop.permute.xlu0 %1027
        %v1030 = vsel %vm900, %v1026, 0
        %v1033 = vsel %vm900, %v1028, 0
        %1035 = vmatprep.subr.bf16.mxu0 0
        %1036 = vmatpush1.bf16.xpose.msra.mxu0 0
        %1037 = vmatprep.subr.bf16.mxu0 0
        %1038 = vmatpush1.bf16.xpose.msra.mxu0 0
        %1039 = vmatprep.subr.bf16.mxu0 0
        %1040 = vmatpush1.bf16.xpose.msra.mxu0 0
        %1041 = vmatprep.subr.bf16.mxu0 0
        %1042 = vmatpush1.bf16.xpose.msra.mxu0 0
        %1043 = vmatprep.subr.bf16.mxu0 0
        %1044 = vmatpush1.bf16.xpose.msra.mxu0 0
        %1045 = vmatprep.subr.bf16.mxu0 0
        %1046 = vmatpush1.bf16.xpose.msra.mxu0 0
        %1047 = vmatprep.subr.bf16.mxu0 0
        %1048 = vmatpush1.bf16.xpose.msra.mxu0 0
        %1049 = vmatprep.subr.bf16.mxu0 0
        %1050 = vmatpush1.bf16.xpose.msra.mxu0 %v1033
        %1051 = vmatprep.subr.bf16.mxu0 0
        %1052 = vmatpush2.bf16.xpose.msra.mxu0 0
        %1053 = vmatprep.subr.bf16.mxu0 0
        %1054 = vmatpush2.bf16.xpose.msra.mxu0 0
        %1055 = vmatprep.subr.bf16.mxu0 0
        %1056 = vmatpush2.bf16.xpose.msra.mxu0 0
        %1057 = vmatprep.subr.bf16.mxu0 0
        %1058 = vmatpush2.bf16.xpose.msra.mxu0 0
        %1059 = vmatprep.subr.bf16.mxu0 0
        %1060 = vmatpush2.bf16.xpose.msra.mxu0 0
        %1061 = vmatprep.subr.bf16.mxu0 0
        %1062 = vmatpush2.bf16.xpose.msra.mxu0 0
        %1063 = vmatprep.subr.bf16.mxu0 0
        %1064 = vmatpush2.bf16.xpose.msra.mxu0 0
        %1065 = vmatprep.subr.bf16.mxu0 0
        %1066 = vmatpush2.bf16.xpose.msra.mxu0 0
        %1067 = vmatprep.mubr.bf16.mxu0 0
        %1068 = vmatmul.mubr.bf16.gmra.mxu0 %v1030
        %v1069 = vpop.f32.mrf.mxu0
        %v1070 = vadd.f32 0.0, %v1069
        %v1071 = vpop.f32.mrf.mxu0
        %v1072 = vpop.f32.mrf.mxu0
        %v1073 = vadd.f32 0.0, %v1072
        %v1074 = vpop.f32.mrf.mxu0
        %1075 = vdwg.mxu0
        %v1076 = vmul.f32 %v1070, 0.35355338
        %v1077 = vmul.f32 %v1073, 0.35355338
        %v1078 = vsel %vm894, %v1076, -1e+30
        %v1079 = vsel %vm895, %v1077, -1e+30
        %v1080 = vsel %vm952, %v1078, -inf
        %1081 = vmax.xlane.f32.xlu0 %v1080
        %v1082 = vpop.xlane.xlu0 %1081
        %v1083 = vsel %vm952, %v1079, -inf
        %1084 = vmax.xlane.f32.xlu0 %v1083
        %v1085 = vpop.xlane.xlu0 %1084
        %v1086 = vsub.f32 %v1078, %v1082
        %v1087 = vsub.f32 %v1079, %v1085
        %v1088 = vmul.f32 %v1086, 1.442695
        %v1089 = vpow.pop %v1088
        %v1090 = vmul.f32 %v1087, 1.442695
        %v1091 = vpow.pop %v1090
        %v1092 = vsel %vm952, %v1089, 0.0
        %1093 = vadd.xlane.f32.xlu0 %v1092
        %v1094 = vpop.xlane.xlu0 %1093
        %v1095 = vsel %vm952, %v1091, 0.0
        %1096 = vadd.xlane.f32.xlu0 %v1095
        %v1097 = vpop.xlane.xlu0 %1096
        %v1098 = vrcp.pop %v1094
        %v1099 = vrcp.pop %v1097
        %v1100 = vmul.f32 %v1089, %v1098
        %v1101 = vmul.f32 %v1091, %v1099
        %v1102 = vpack.c.bf16 %v1101, %v1100
        %1103 = vrot.lane.b32.xlu0 %v896, 56
        %v1104 = vpop.permute.xlu0 %1103
        %v1107 = vsel %vm952, %v1102, 0
        %1109 = vmatprep.subr.bf16.mxu0 0
        %1110 = vmatpush1.bf16.msra.mxu0 0
        %1111 = vmatprep.subr.bf16.mxu0 0
        %1112 = vmatpush1.bf16.msra.mxu0 0
        %1113 = vmatprep.subr.bf16.mxu0 0
        %1114 = vmatpush1.bf16.msra.mxu0 0
        %1115 = vmatprep.subr.bf16.mxu0 0
        %1116 = vmatpush1.bf16.msra.mxu0 0
        %1117 = vmatprep.subr.bf16.mxu0 0
        %1118 = vmatpush1.bf16.msra.mxu0 0
        %1119 = vmatprep.subr.bf16.mxu0 0
        %1120 = vmatpush1.bf16.msra.mxu0 0
        %1121 = vmatprep.subr.bf16.mxu0 0
        %1122 = vmatpush1.bf16.msra.mxu0 0
        %1123 = vmatprep.subr.bf16.mxu0 0
        %1124 = vmatpush1.bf16.msra.mxu0 %v1104
        %1125 = vmatprep.subr.bf16.mxu0 0
        %1126 = vmatpush2.bf16.msra.mxu0 0
        %1127 = vmatprep.subr.bf16.mxu0 0
        %1128 = vmatpush2.bf16.msra.mxu0 0
        %1129 = vmatprep.subr.bf16.mxu0 0
        %1130 = vmatpush2.bf16.msra.mxu0 0
        %1131 = vmatprep.subr.bf16.mxu0 0
        %1132 = vmatpush2.bf16.msra.mxu0 0
        %1133 = vmatprep.subr.bf16.mxu0 0
        %1134 = vmatpush2.bf16.msra.mxu0 0
        %1135 = vmatprep.subr.bf16.mxu0 0
        %1136 = vmatpush2.bf16.msra.mxu0 0
        %1137 = vmatprep.subr.bf16.mxu0 0
        %1138 = vmatpush2.bf16.msra.mxu0 0
        %1139 = vmatprep.subr.bf16.mxu0 0
        %1140 = vmatpush2.bf16.msra.mxu0 0
        %1141 = vmatprep.mubr.bf16.mxu0 0
        %1142 = vmatmul.mubr.bf16.gmra.mxu0 %v1107
        %v1143 = vpop.f32.mrf.mxu0
        %v1144 = vadd.f32 0.0, %v1143
        %v1145 = vpop.f32.mrf.mxu0
        %v1146 = vpop.f32.mrf.mxu0
        %v1147 = vadd.f32 0.0, %v1146
        %v1148 = vpop.f32.mrf.mxu0
        %1149 = vdwg.mxu0
        %v1150 = vpack.c.bf16 %v1147, %v1144
        %s1151 = scalar_lea.vmem %s675, 4
        %v1152 = vld [vmem:[%s1151] sm:$0xf]
        %v1154 = vsel %vm900, %v1150, 0
        %vm1156 = vcmask 1043456
        %v1158 = vsel %vm1156, %v1152, 0
        %1160 = vmatprep.subr.bf16.mxu0 0
        %1161 = vmatpush1.bf16.msra.mxu0 0
        %1162 = vmatprep.subr.bf16.mxu0 0
        %1163 = vmatpush1.bf16.msra.mxu0 0
        %1164 = vmatprep.subr.bf16.mxu0 0
        %1165 = vmatpush1.bf16.msra.mxu0 0
        %1166 = vmatprep.subr.bf16.mxu0 0
        %1167 = vmatpush1.bf16.msra.mxu0 0
        %1168 = vmatprep.subr.bf16.mxu0 0
        %1169 = vmatpush1.bf16.msra.mxu0 0
        %1170 = vmatprep.subr.bf16.mxu0 0
        %1171 = vmatpush1.bf16.msra.mxu0 0
        %1172 = vmatprep.subr.bf16.mxu0 0
        %1173 = vmatpush1.bf16.msra.mxu0 0
        %1174 = vmatprep.subr.bf16.mxu0 0
        %1175 = vmatpush1.bf16.msra.mxu0 %v1158
        %1176 = vmatprep.subr.bf16.mxu0 0
        %1177 = vmatpush2.bf16.msra.mxu0 0
        %1178 = vmatprep.subr.bf16.mxu0 0
        %1179 = vmatpush2.bf16.msra.mxu0 0
        %1180 = vmatprep.subr.bf16.mxu0 0
        %1181 = vmatpush2.bf16.msra.mxu0 0
        %1182 = vmatprep.subr.bf16.mxu0 0
        %1183 = vmatpush2.bf16.msra.mxu0 0
        %1184 = vmatprep.subr.bf16.mxu0 0
        %1185 = vmatpush2.bf16.msra.mxu0 0
        %1186 = vmatprep.subr.bf16.mxu0 0
        %1187 = vmatpush2.bf16.msra.mxu0 0
        %1188 = vmatprep.subr.bf16.mxu0 0
        %1189 = vmatpush2.bf16.msra.mxu0 0
        %1190 = vmatprep.subr.bf16.mxu0 0
        %1191 = vmatpush2.bf16.msra.mxu0 0
        %1192 = vmatprep.mubr.bf16.mxu0 0
        %1193 = vmatmul.mubr.bf16.gmra.mxu0 %v1154
        %v1194 = vpop.f32.mrf.mxu0
        %v1195 = vadd.f32 0.0, %v1194
        %v1196 = vpop.f32.mrf.mxu0
        %v1197 = vpop.f32.mrf.mxu0
        %v1198 = vadd.f32 0.0, %v1197
        %v1199 = vpop.f32.mrf.mxu0
        %1200 = vdwg.mxu0
        %v1202 = vsel %vm900, %v1023, 0
        %v1205 = vsel %vm1156, %v1024, 0
        %1207 = vmatprep.subr.bf16.mxu0 0
        %1208 = vmatpush1.bf16.msra.mxu0 0
        %1209 = vmatprep.subr.bf16.mxu0 0
        %1210 = vmatpush1.bf16.msra.mxu0 0
        %1211 = vmatprep.subr.bf16.mxu0 0
        %1212 = vmatpush1.bf16.msra.mxu0 0
        %1213 = vmatprep.subr.bf16.mxu0 0
        %1214 = vmatpush1.bf16.msra.mxu0 0
        %1215 = vmatprep.subr.bf16.mxu0 0
        %1216 = vmatpush1.bf16.msra.mxu0 0
        %1217 = vmatprep.subr.bf16.mxu0 0
        %1218 = vmatpush1.bf16.msra.mxu0 0
        %1219 = vmatprep.subr.bf16.mxu0 0
        %1220 = vmatpush1.bf16.msra.mxu0 0
        %1221 = vmatprep.subr.bf16.mxu0 0
        %1222 = vmatpush1.bf16.msra.mxu0 %v1205
        %1223 = vmatprep.subr.bf16.mxu0 0
        %1224 = vmatpush2.bf16.msra.mxu0 0
        %1225 = vmatprep.subr.bf16.mxu0 0
        %1226 = vmatpush2.bf16.msra.mxu0 0
        %1227 = vmatprep.subr.bf16.mxu0 0
        %1228 = vmatpush2.bf16.msra.mxu0 0
        %1229 = vmatprep.subr.bf16.mxu0 0
        %1230 = vmatpush2.bf16.msra.mxu0 0
        %1231 = vmatprep.subr.bf16.mxu0 0
        %1232 = vmatpush2.bf16.msra.mxu0 0
        %1233 = vmatprep.subr.bf16.mxu0 0
        %1234 = vmatpush2.bf16.msra.mxu0 0
        %1235 = vmatprep.subr.bf16.mxu0 0
        %1236 = vmatpush2.bf16.msra.mxu0 0
        %1237 = vmatprep.subr.bf16.mxu0 0
        %1238 = vmatpush2.bf16.msra.mxu0 0
        %1239 = vmatprep.mubr.bf16.mxu0 0
        %1240 = vmatmul.mubr.bf16.gmra.mxu0 %v1202
        %v1241 = vpop.f32.mrf.mxu0
        %v1242 = vadd.f32 %v1195, %v1241
        %v1243 = vpop.f32.mrf.mxu0
        %v1244 = vpop.f32.mrf.mxu0
        %v1245 = vadd.f32 %v1198, %v1244
        %v1246 = vpop.f32.mrf.mxu0
        %1247 = vdwg.mxu0
        %1248 = vrot.lane.b32.xlu0 %v896, 112
        %v1249 = vpop.permute.xlu0 %1248
        %1250 = vrot.lane.b32.xlu0 %v896, 80
        %v1251 = vpop.permute.xlu0 %1250
        %v1253 = vsel %vm900, %v1249, 0
        %v1256 = vsel %vm900, %v1251, 0
        %1258 = vmatprep.subr.bf16.mxu0 0
        %1259 = vmatpush1.bf16.xpose.msra.mxu0 0
        %1260 = vmatprep.subr.bf16.mxu0 0
        %1261 = vmatpush1.bf16.xpose.msra.mxu0 0
        %1262 = vmatprep.subr.bf16.mxu0 0
        %1263 = vmatpush1.bf16.xpose.msra.mxu0 0
        %1264 = vmatprep.subr.bf16.mxu0 0
        %1265 = vmatpush1.bf16.xpose.msra.mxu0 0
        %1266 = vmatprep.subr.bf16.mxu0 0
        %1267 = vmatpush1.bf16.xpose.msra.mxu0 0
        %1268 = vmatprep.subr.bf16.mxu0 0
        %1269 = vmatpush1.bf16.xpose.msra.mxu0 0
        %1270 = vmatprep.subr.bf16.mxu0 0
        %1271 = vmatpush1.bf16.xpose.msra.mxu0 0
        %1272 = vmatprep.subr.bf16.mxu0 0
        %1273 = vmatpush1.bf16.xpose.msra.mxu0 %v1256
        %1274 = vmatprep.subr.bf16.mxu0 0
        %1275 = vmatpush2.bf16.xpose.msra.mxu0 0
        %1276 = vmatprep.subr.bf16.mxu0 0
        %1277 = vmatpush2.bf16.xpose.msra.mxu0 0
        %1278 = vmatprep.subr.bf16.mxu0 0
        %1279 = vmatpush2.bf16.xpose.msra.mxu0 0
        %1280 = vmatprep.subr.bf16.mxu0 0
        %1281 = vmatpush2.bf16.xpose.msra.mxu0 0
        %1282 = vmatprep.subr.bf16.mxu0 0
        %1283 = vmatpush2.bf16.xpose.msra.mxu0 0
        %1284 = vmatprep.subr.bf16.mxu0 0
        %1285 = vmatpush2.bf16.xpose.msra.mxu0 0
        %1286 = vmatprep.subr.bf16.mxu0 0
        %1287 = vmatpush2.bf16.xpose.msra.mxu0 0
        %1288 = vmatprep.subr.bf16.mxu0 0
        %1289 = vmatpush2.bf16.xpose.msra.mxu0 0
        %1290 = vmatprep.mubr.bf16.mxu0 0
        %1291 = vmatmul.mubr.bf16.gmra.mxu0 %v1253
        %v1292 = vpop.f32.mrf.mxu0
        %v1293 = vadd.f32 0.0, %v1292
        %v1294 = vpop.f32.mrf.mxu0
        %v1295 = vpop.f32.mrf.mxu0
        %v1296 = vadd.f32 0.0, %v1295
        %v1297 = vpop.f32.mrf.mxu0
        %1298 = vdwg.mxu0
        %v1299 = vmul.f32 %v1293, 0.35355338
        %v1300 = vmul.f32 %v1296, 0.35355338
        %v1301 = vsel %vm894, %v1299, -1e+30
        %v1302 = vsel %vm895, %v1300, -1e+30
        %v1303 = vsel %vm952, %v1301, -inf
        %1304 = vmax.xlane.f32.xlu0 %v1303
        %v1305 = vpop.xlane.xlu0 %1304
        %v1306 = vsel %vm952, %v1302, -inf
        %1307 = vmax.xlane.f32.xlu0 %v1306
        %v1308 = vpop.xlane.xlu0 %1307
        %v1309 = vsub.f32 %v1301, %v1305
        %v1310 = vsub.f32 %v1302, %v1308
        %v1311 = vmul.f32 %v1309, 1.442695
        %v1312 = vpow.pop %v1311
        %v1313 = vmul.f32 %v1310, 1.442695
        %v1314 = vpow.pop %v1313
        %v1315 = vsel %vm952, %v1312, 0.0
        %1316 = vadd.xlane.f32.xlu0 %v1315
        %v1317 = vpop.xlane.xlu0 %1316
        %v1318 = vsel %vm952, %v1314, 0.0
        %1319 = vadd.xlane.f32.xlu0 %v1318
        %v1320 = vpop.xlane.xlu0 %1319
        %v1321 = vrcp.pop %v1317
        %v1322 = vrcp.pop %v1320
        %v1323 = vmul.f32 %v1312, %v1321
        %v1324 = vmul.f32 %v1314, %v1322
        %v1325 = vpack.c.bf16 %v1324, %v1323
        %1326 = vrot.lane.b32.xlu0 %v896, 48
        %v1327 = vpop.permute.xlu0 %1326
        %v1330 = vsel %vm952, %v1325, 0
        %1332 = vmatprep.subr.bf16.mxu0 0
        %1333 = vmatpush1.bf16.msra.mxu0 0
        %1334 = vmatprep.subr.bf16.mxu0 0
        %1335 = vmatpush1.bf16.msra.mxu0 0
        %1336 = vmatprep.subr.bf16.mxu0 0
        %1337 = vmatpush1.bf16.msra.mxu0 0
        %1338 = vmatprep.subr.bf16.mxu0 0
        %1339 = vmatpush1.bf16.msra.mxu0 0
        %1340 = vmatprep.subr.bf16.mxu0 0
        %1341 = vmatpush1.bf16.msra.mxu0 0
        %1342 = vmatprep.subr.bf16.mxu0 0
        %1343 = vmatpush1.bf16.msra.mxu0 0
        %1344 = vmatprep.subr.bf16.mxu0 0
        %1345 = vmatpush1.bf16.msra.mxu0 0
        %1346 = vmatprep.subr.bf16.mxu0 0
        %1347 = vmatpush1.bf16.msra.mxu0 %v1327
        %1348 = vmatprep.subr.bf16.mxu0 0
        %1349 = vmatpush2.bf16.msra.mxu0 0
        %1350 = vmatprep.subr.bf16.mxu0 0
        %1351 = vmatpush2.bf16.msra.mxu0 0
        %1352 = vmatprep.subr.bf16.mxu0 0
        %1353 = vmatpush2.bf16.msra.mxu0 0
        %1354 = vmatprep.subr.bf16.mxu0 0
        %1355 = vmatpush2.bf16.msra.mxu0 0
        %1356 = vmatprep.subr.bf16.mxu0 0
        %1357 = vmatpush2.bf16.msra.mxu0 0
        %1358 = vmatprep.subr.bf16.mxu0 0
        %1359 = vmatpush2.bf16.msra.mxu0 0
        %1360 = vmatprep.subr.bf16.mxu0 0
        %1361 = vmatpush2.bf16.msra.mxu0 0
        %1362 = vmatprep.subr.bf16.mxu0 0
        %1363 = vmatpush2.bf16.msra.mxu0 0
        %1364 = vmatprep.mubr.bf16.mxu0 0
        %1365 = vmatmul.mubr.bf16.gmra.mxu0 %v1330
        %v1366 = vpop.f32.mrf.mxu0
        %v1367 = vadd.f32 0.0, %v1366
        %v1368 = vpop.f32.mrf.mxu0
        %v1369 = vpop.f32.mrf.mxu0
        %v1370 = vadd.f32 0.0, %v1369
        %v1371 = vpop.f32.mrf.mxu0
        %1372 = vdwg.mxu0
        %v1373 = vpack.c.bf16 %v1370, %v1367
        %s1374 = scalar_lea.vmem %s675, 8
        %v1375 = vld [vmem:[%s1374] sm:$0xf]
        %v1377 = vsel %vm900, %v1373, 0
        %v1380 = vsel %vm1156, %v1375, 0
        %1382 = vmatprep.subr.bf16.mxu0 0
        %1383 = vmatpush1.bf16.msra.mxu0 0
        %1384 = vmatprep.subr.bf16.mxu0 0
        %1385 = vmatpush1.bf16.msra.mxu0 0
        %1386 = vmatprep.subr.bf16.mxu0 0
        %1387 = vmatpush1.bf16.msra.mxu0 0
        %1388 = vmatprep.subr.bf16.mxu0 0
        %1389 = vmatpush1.bf16.msra.mxu0 0
        %1390 = vmatprep.subr.bf16.mxu0 0
        %1391 = vmatpush1.bf16.msra.mxu0 0
        %1392 = vmatprep.subr.bf16.mxu0 0
        %1393 = vmatpush1.bf16.msra.mxu0 0
        %1394 = vmatprep.subr.bf16.mxu0 0
        %1395 = vmatpush1.bf16.msra.mxu0 0
        %1396 = vmatprep.subr.bf16.mxu0 0
        %1397 = vmatpush1.bf16.msra.mxu0 %v1380
        %1398 = vmatprep.subr.bf16.mxu0 0
        %1399 = vmatpush2.bf16.msra.mxu0 0
        %1400 = vmatprep.subr.bf16.mxu0 0
        %1401 = vmatpush2.bf16.msra.mxu0 0
        %1402 = vmatprep.subr.bf16.mxu0 0
        %1403 = vmatpush2.bf16.msra.mxu0 0
        %1404 = vmatprep.subr.bf16.mxu0 0
        %1405 = vmatpush2.bf16.msra.mxu0 0
        %1406 = vmatprep.subr.bf16.mxu0 0
        %1407 = vmatpush2.bf16.msra.mxu0 0
        %1408 = vmatprep.subr.bf16.mxu0 0
        %1409 = vmatpush2.bf16.msra.mxu0 0
        %1410 = vmatprep.subr.bf16.mxu0 0
        %1411 = vmatpush2.bf16.msra.mxu0 0
        %1412 = vmatprep.subr.bf16.mxu0 0
        %1413 = vmatpush2.bf16.msra.mxu0 0
        %1414 = vmatprep.mubr.bf16.mxu0 0
        %1415 = vmatmul.mubr.bf16.gmra.mxu0 %v1377
        %v1416 = vpop.f32.mrf.mxu0
        %v1417 = vadd.f32 0.0, %v1416
        %v1418 = vpop.f32.mrf.mxu0
        %v1419 = vpop.f32.mrf.mxu0
        %v1420 = vadd.f32 0.0, %v1419
        %v1421 = vpop.f32.mrf.mxu0
        %1422 = vdwg.mxu0
        %v1423 = vadd.f32 %v1242, %v1417
        %v1424 = vadd.f32 %v1245, %v1420
        %1425 = vrot.lane.b32.xlu0 %v896, 104
        %v1426 = vpop.permute.xlu0 %1425
        %1427 = vrot.lane.b32.xlu0 %v896, 72
        %v1428 = vpop.permute.xlu0 %1427
        %v1430 = vsel %vm900, %v1426, 0
        %v1433 = vsel %vm900, %v1428, 0
        %1435 = vmatprep.subr.bf16.mxu0 0
        %1436 = vmatpush1.bf16.xpose.msra.mxu0 0
        %1437 = vmatprep.subr.bf16.mxu0 0
        %1438 = vmatpush1.bf16.xpose.msra.mxu0 0
        %1439 = vmatprep.subr.bf16.mxu0 0
        %1440 = vmatpush1.bf16.xpose.msra.mxu0 0
        %1441 = vmatprep.subr.bf16.mxu0 0
        %1442 = vmatpush1.bf16.xpose.msra.mxu0 0
        %1443 = vmatprep.subr.bf16.mxu0 0
        %1444 = vmatpush1.bf16.xpose.msra.mxu0 0
        %1445 = vmatprep.subr.bf16.mxu0 0
        %1446 = vmatpush1.bf16.xpose.msra.mxu0 0
        %1447 = vmatprep.subr.bf16.mxu0 0
        %1448 = vmatpush1.bf16.xpose.msra.mxu0 0
        %1449 = vmatprep.subr.bf16.mxu0 0
        %1450 = vmatpush1.bf16.xpose.msra.mxu0 %v1433
        %1451 = vmatprep.subr.bf16.mxu0 0
        %1452 = vmatpush2.bf16.xpose.msra.mxu0 0
        %1453 = vmatprep.subr.bf16.mxu0 0
        %1454 = vmatpush2.bf16.xpose.msra.mxu0 0
        %1455 = vmatprep.subr.bf16.mxu0 0
        %1456 = vmatpush2.bf16.xpose.msra.mxu0 0
        %1457 = vmatprep.subr.bf16.mxu0 0
        %1458 = vmatpush2.bf16.xpose.msra.mxu0 0
        %1459 = vmatprep.subr.bf16.mxu0 0
        %1460 = vmatpush2.bf16.xpose.msra.mxu0 0
        %1461 = vmatprep.subr.bf16.mxu0 0
        %1462 = vmatpush2.bf16.xpose.msra.mxu0 0
        %1463 = vmatprep.subr.bf16.mxu0 0
        %1464 = vmatpush2.bf16.xpose.msra.mxu0 0
        %1465 = vmatprep.subr.bf16.mxu0 0
        %1466 = vmatpush2.bf16.xpose.msra.mxu0 0
        %1467 = vmatprep.mubr.bf16.mxu0 0
        %1468 = vmatmul.mubr.bf16.gmra.mxu0 %v1430
        %v1469 = vpop.f32.mrf.mxu0
        %v1470 = vadd.f32 0.0, %v1469
        %v1471 = vpop.f32.mrf.mxu0
        %v1472 = vpop.f32.mrf.mxu0
        %v1473 = vadd.f32 0.0, %v1472
        %v1474 = vpop.f32.mrf.mxu0
        %1475 = vdwg.mxu0
        %v1476 = vmul.f32 %v1470, 0.35355338
        %v1477 = vmul.f32 %v1473, 0.35355338
        %v1478 = vsel %vm894, %v1476, -1e+30
        %v1479 = vsel %vm895, %v1477, -1e+30
        %v1480 = vsel %vm952, %v1478, -inf
        %1481 = vmax.xlane.f32.xlu0 %v1480
        %v1482 = vpop.xlane.xlu0 %1481
        %v1483 = vsel %vm952, %v1479, -inf
        %1484 = vmax.xlane.f32.xlu0 %v1483
        %v1485 = vpop.xlane.xlu0 %1484
        %v1486 = vsub.f32 %v1478, %v1482
        %v1487 = vsub.f32 %v1479, %v1485
        %v1488 = vmul.f32 %v1486, 1.442695
        %v1489 = vpow.pop %v1488
        %v1490 = vmul.f32 %v1487, 1.442695
        %v1491 = vpow.pop %v1490
        %v1492 = vsel %vm952, %v1489, 0.0
        %1493 = vadd.xlane.f32.xlu0 %v1492
        %v1494 = vpop.xlane.xlu0 %1493
        %v1495 = vsel %vm952, %v1491, 0.0
        %1496 = vadd.xlane.f32.xlu0 %v1495
        %v1497 = vpop.xlane.xlu0 %1496
        %v1498 = vrcp.pop %v1494
        %v1499 = vrcp.pop %v1497
        %v1500 = vmul.f32 %v1489, %v1498
        %v1501 = vmul.f32 %v1491, %v1499
        %v1502 = vpack.c.bf16 %v1501, %v1500
        %1503 = vrot.lane.b32.xlu0 %v896, 40
        %v1504 = vpop.permute.xlu0 %1503
        %v1507 = vsel %vm952, %v1502, 0
        %1509 = vmatprep.subr.bf16.mxu0 0
        %1510 = vmatpush1.bf16.msra.mxu0 0
        %1511 = vmatprep.subr.bf16.mxu0 0
        %1512 = vmatpush1.bf16.msra.mxu0 0
        %1513 = vmatprep.subr.bf16.mxu0 0
        %1514 = vmatpush1.bf16.msra.mxu0 0
        %1515 = vmatprep.subr.bf16.mxu0 0
        %1516 = vmatpush1.bf16.msra.mxu0 0
        %1517 = vmatprep.subr.bf16.mxu0 0
        %1518 = vmatpush1.bf16.msra.mxu0 0
        %1519 = vmatprep.subr.bf16.mxu0 0
        %1520 = vmatpush1.bf16.msra.mxu0 0
        %1521 = vmatprep.subr.bf16.mxu0 0
        %1522 = vmatpush1.bf16.msra.mxu0 0
        %1523 = vmatprep.subr.bf16.mxu0 0
        %1524 = vmatpush1.bf16.msra.mxu0 %v1504
        %1525 = vmatprep.subr.bf16.mxu0 0
        %1526 = vmatpush2.bf16.msra.mxu0 0
        %1527 = vmatprep.subr.bf16.mxu0 0
        %1528 = vmatpush2.bf16.msra.mxu0 0
        %1529 = vmatprep.subr.bf16.mxu0 0
        %1530 = vmatpush2.bf16.msra.mxu0 0
        %1531 = vmatprep.subr.bf16.mxu0 0
        %1532 = vmatpush2.bf16.msra.mxu0 0
        %1533 = vmatprep.subr.bf16.mxu0 0
        %1534 = vmatpush2.bf16.msra.mxu0 0
        %1535 = vmatprep.subr.bf16.mxu0 0
        %1536 = vmatpush2.bf16.msra.mxu0 0
        %1537 = vmatprep.subr.bf16.mxu0 0
        %1538 = vmatpush2.bf16.msra.mxu0 0
        %1539 = vmatprep.subr.bf16.mxu0 0
        %1540 = vmatpush2.bf16.msra.mxu0 0
        %1541 = vmatprep.mubr.bf16.mxu0 0
        %1542 = vmatmul.mubr.bf16.gmra.mxu0 %v1507
        %v1543 = vpop.f32.mrf.mxu0
        %v1544 = vadd.f32 0.0, %v1543
        %v1545 = vpop.f32.mrf.mxu0
        %v1546 = vpop.f32.mrf.mxu0
        %v1547 = vadd.f32 0.0, %v1546
        %v1548 = vpop.f32.mrf.mxu0
        %1549 = vdwg.mxu0
        %v1550 = vpack.c.bf16 %v1547, %v1544
        %s1551 = scalar_lea.vmem %s675, 12
        %v1552 = vld [vmem:[%s1551] sm:$0xf]
        %v1554 = vsel %vm900, %v1550, 0
        %v1557 = vsel %vm1156, %v1552, 0
        %1559 = vmatprep.subr.bf16.mxu0 0
        %1560 = vmatpush1.bf16.msra.mxu0 0
        %1561 = vmatprep.subr.bf16.mxu0 0
        %1562 = vmatpush1.bf16.msra.mxu0 0
        %1563 = vmatprep.subr.bf16.mxu0 0
        %1564 = vmatpush1.bf16.msra.mxu0 0
        %1565 = vmatprep.subr.bf16.mxu0 0
        %1566 = vmatpush1.bf16.msra.mxu0 0
        %1567 = vmatprep.subr.bf16.mxu0 0
        %1568 = vmatpush1.bf16.msra.mxu0 0
        %1569 = vmatprep.subr.bf16.mxu0 0
        %1570 = vmatpush1.bf16.msra.mxu0 0
        %1571 = vmatprep.subr.bf16.mxu0 0
        %1572 = vmatpush1.bf16.msra.mxu0 0
        %1573 = vmatprep.subr.bf16.mxu0 0
        %1574 = vmatpush1.bf16.msra.mxu0 %v1557
        %1575 = vmatprep.subr.bf16.mxu0 0
        %1576 = vmatpush2.bf16.msra.mxu0 0
        %1577 = vmatprep.subr.bf16.mxu0 0
        %1578 = vmatpush2.bf16.msra.mxu0 0
        %1579 = vmatprep.subr.bf16.mxu0 0
        %1580 = vmatpush2.bf16.msra.mxu0 0
        %1581 = vmatprep.subr.bf16.mxu0 0
        %1582 = vmatpush2.bf16.msra.mxu0 0
        %1583 = vmatprep.subr.bf16.mxu0 0
        %1584 = vmatpush2.bf16.msra.mxu0 0
        %1585 = vmatprep.subr.bf16.mxu0 0
        %1586 = vmatpush2.bf16.msra.mxu0 0
        %1587 = vmatprep.subr.bf16.mxu0 0
        %1588 = vmatpush2.bf16.msra.mxu0 0
        %1589 = vmatprep.subr.bf16.mxu0 0
        %1590 = vmatpush2.bf16.msra.mxu0 0
        %1591 = vmatprep.mubr.bf16.mxu0 0
        %1592 = vmatmul.mubr.bf16.gmra.mxu0 %v1554
        %v1593 = vpop.f32.mrf.mxu0
        %v1594 = vadd.f32 0.0, %v1593
        %v1595 = vpop.f32.mrf.mxu0
        %v1596 = vpop.f32.mrf.mxu0
        %v1597 = vadd.f32 0.0, %v1596
        %v1598 = vpop.f32.mrf.mxu0
        %1599 = vdwg.mxu0
        %v1600 = vadd.f32 %v1423, %v1594
        %v1601 = vadd.f32 %v1424, %v1597
        %v1602 = vld [vmem:[%s678] sm:$0x1]
        %v1604 = vlaneseq
        %v1605 = vshrl.u32 %v1604, 7
        %v1606 = vsub.s32 0, %v1605
        %v1607 = vrot.slane %v1602, %v1606
        %v1609 = vadd.f32 %v1600, %v1607
        %v1610 = vadd.f32 %v1601, %v1607
        %v1611 = vadd.f32 %v782, %v1609
        %v1612 = vadd.f32 %v783, %v1610
        %v1613 = vld [vmem:[%s681] sm:$0x1]
        %v1614 = vld [vmem:[%s684] sm:$0x1]
        %v1615 = vsel %vm808, %v1611, 0.0
        %1616 = vadd.xlane.f32.xlu0 %v1615
        %v1617 = vpop.xlane.xlu0 %1616
        %v1618 = vsel %vm808, %v1612, 0.0
        %1619 = vadd.xlane.f32.xlu0 %v1618
        %v1620 = vpop.xlane.xlu0 %1619
        %v1621 = vrcp.pop 32.0
        %v1622 = vmul.f32 %v1617, %v1621
        %v1623 = vmul.f32 %v1620, %v1621
        %v1624 = vsub.f32 %v1611, %v1622
        %v1625 = vsub.f32 %v1612, %v1623
        %v1626 = vmul.f32 %v1624, %v1624
        %v1627 = vmul.f32 %v1625, %v1625
        %v1628 = vsel %vm808, %v1626, 0.0
        %1629 = vadd.xlane.f32.xlu0 %v1628
        %v1630 = vpop.xlane.xlu0 %1629
        %v1631 = vsel %vm808, %v1627, 0.0
        %1632 = vadd.xlane.f32.xlu0 %v1631
        %v1633 = vpop.xlane.xlu0 %1632
        %v1634 = vmul.f32 %v1630, %v1621
        %v1635 = vmul.f32 %v1633, %v1621
        %v1636 = vadd.f32 %v1634, 1e-05
        %v1637 = vadd.f32 %v1635, 1e-05
        %v1638 = vrsqrt.pop %v1636
        %v1639 = vrsqrt.pop %v1637
        %v1640 = vmul.f32 %v1624, %v1638
        %v1641 = vmul.f32 %v1625, %v1639
        %v1643 = vlaneseq
        %v1644 = vshrl.u32 %v1643, 7
        %v1645 = vsub.s32 0, %v1644
        %v1646 = vrot.slane %v1613, %v1645
        %v1648 = vmul.f32 %v1640, %v1646
        %v1649 = vmul.f32 %v1641, %v1646
        %v1651 = vlaneseq
        %v1652 = vshrl.u32 %v1651, 7
        %v1653 = vsub.s32 0, %v1652
        %v1654 = vrot.slane %v1614, %v1653
        %v1656 = vadd.f32 %v1648, %v1654
        %v1657 = vadd.f32 %v1649, %v1654
        %v1658 = vpack.c.bf16 %v1657, %v1656
        %v1659 = vld [vmem:[%s695] sm:$0xf]
        %v1660 = vld [vmem:[%s695 + $0x4] sm:$0xf]
        %v1661 = vld [vmem:[%s695 + $0x8] sm:$0xf]
        %v1662 = vld [vmem:[%s695 + $0xc] sm:$0xf]
        %v1663 = vld [vmem:[%s698] sm:$0x1]
        %v1665 = vlaneseq
        %v1666 = vshrl.u32 %v1665, 7
        %v1667 = vsub.s32 0, %v1666
        %v1668 = vrot.slane %v1663, %v1667
        %v1674 = vunpack.c.l.b16 %v1659
        %v1675 = vunpack.c.l.b16 %v1660
        %v1676 = vunpack.c.l.b16 %v1661
        %v1677 = vunpack.c.l.b16 %v1662
        %v1678 = vpack.c.b16 %v1675, %v1674
        %v1679 = vpack.c.b16 %v1677, %v1676
        %v1683 = vsel %vm808, %v1658, 0
        %1685 = vmatprep.subr.bf16.mxu0 0
        %1686 = vmatpush1.bf16.msra.mxu0 0
        %1687 = vmatprep.subr.bf16.mxu0 0
        %1688 = vmatpush1.bf16.msra.mxu0 0
        %1689 = vmatprep.subr.bf16.mxu0 0
        %1690 = vmatpush1.bf16.msra.mxu0 0
        %1691 = vmatprep.subr.bf16.mxu0 0
        %1692 = vmatpush1.bf16.msra.mxu0 0
        %1693 = vmatprep.subr.bf16.mxu0 0
        %1694 = vmatpush1.bf16.msra.mxu0 0
        %1695 = vmatprep.subr.bf16.mxu0 0
        %1696 = vmatpush1.bf16.msra.mxu0 0
        %1697 = vmatprep.subr.bf16.mxu0 0
        %1698 = vmatpush1.bf16.msra.mxu0 %v1679
        %1699 = vmatprep.subr.bf16.mxu0 0
        %1700 = vmatpush1.bf16.msra.mxu0 %v1678
        %1701 = vmatprep.subr.bf16.mxu0 0
        %1702 = vmatpush2.bf16.msra.mxu0 0
        %1703 = vmatprep.subr.bf16.mxu0 0
        %1704 = vmatpush2.bf16.msra.mxu0 0
        %1705 = vmatprep.subr.bf16.mxu0 0
        %1706 = vmatpush2.bf16.msra.mxu0 0
        %1707 = vmatprep.subr.bf16.mxu0 0
        %1708 = vmatpush2.bf16.msra.mxu0 0
        %1709 = vmatprep.subr.bf16.mxu0 0
        %1710 = vmatpush2.bf16.msra.mxu0 0
        %1711 = vmatprep.subr.bf16.mxu0 0
        %1712 = vmatpush2.bf16.msra.mxu0 0
        %1713 = vmatprep.subr.bf16.mxu0 0
        %1714 = vmatpush2.bf16.msra.mxu0 0
        %1715 = vmatprep.subr.bf16.mxu0 0
        %1716 = vmatpush2.bf16.msra.mxu0 0
        %1717 = vmatprep.mubr.bf16.mxu0 0
        %1718 = vmatmul.mubr.bf16.gmra.mxu0 %v1683
        %v1719 = vpop.f32.mrf.mxu0
        %v1720 = vadd.f32 %v1668, %v1719
        %v1721 = vpop.f32.mrf.mxu0
        %v1722 = vpop.f32.mrf.mxu0
        %v1723 = vadd.f32 %v1668, %v1722
        %v1724 = vpop.f32.mrf.mxu0
        %1725 = vdwg.mxu0
        %v1726 = vmax.f32 %v1720, 0.0
        %v1727 = vmax.f32 %v1723, 0.0
        %v1728 = vpack.c.bf16 %v1727, %v1726
        %v1729 = vld [vmem:[%s703] sm:$0xf]
        %v1730 = vld [vmem:[%s703 + $0x4] sm:$0xf]
        %v1731 = vld [vmem:[%s703 + $0x8] sm:$0xf]
        %v1732 = vld [vmem:[%s703 + $0xc] sm:$0xf]
        %v1733 = vld [vmem:[%s703 + $0x10] sm:$0xf]
        %v1734 = vld [vmem:[%s703 + $0x14] sm:$0xf]
        %v1735 = vld [vmem:[%s703 + $0x18] sm:$0xf]
        %v1736 = vld [vmem:[%s703 + $0x1c] sm:$0xf]
        %v1737 = vld [vmem:[%s703 + $0x20] sm:$0xf]
        %v1738 = vld [vmem:[%s703 + $0x24] sm:$0xf]
        %v1739 = vld [vmem:[%s703 + $0x28] sm:$0xf]
        %v1740 = vld [vmem:[%s703 + $0x2c] sm:$0xf]
        %v1741 = vld [vmem:[%s703 + $0x30] sm:$0xf]
        %v1742 = vld [vmem:[%s703 + $0x34] sm:$0xf]
        %v1743 = vld [vmem:[%s703 + $0x38] sm:$0xf]
        %v1744 = vld [vmem:[%s703 + $0x3c] sm:$0xf]
        %v1745 = vld [vmem:[%s706] sm:$0x1]
        %v1747 = vlaneseq
        %v1748 = vshrl.u32 %v1747, 7
        %v1749 = vsub.s32 0, %v1748
        %v1750 = vrot.slane %v1745, %v1749
        %v1768 = vunpack.c.l.b16 %v1729
        %v1769 = vunpack.c.l.b16 %v1730
        %v1770 = vunpack.c.l.b16 %v1731
        %v1771 = vunpack.c.l.b16 %v1732
        %v1772 = vunpack.c.l.b16 %v1733
        %v1773 = vunpack.c.l.b16 %v1734
        %v1774 = vunpack.c.l.b16 %v1735
        %v1775 = vunpack.c.l.b16 %v1736
        %v1776 = vunpack.c.l.b16 %v1737
        %v1777 = vunpack.c.l.b16 %v1738
        %v1778 = vunpack.c.l.b16 %v1739
        %v1779 = vunpack.c.l.b16 %v1740
        %v1780 = vunpack.c.l.b16 %v1741
        %v1781 = vunpack.c.l.b16 %v1742
        %v1782 = vunpack.c.l.b16 %v1743
        %v1783 = vunpack.c.l.b16 %v1744
        %v1784 = vpack.c.b16 %v1769, %v1768
        %v1785 = vpack.c.b16 %v1771, %v1770
        %v1786 = vpack.c.b16 %v1773, %v1772
        %v1787 = vpack.c.b16 %v1775, %v1774
        %v1788 = vpack.c.b16 %v1777, %v1776
        %v1789 = vpack.c.b16 %v1779, %v1778
        %v1790 = vpack.c.b16 %v1781, %v1780
        %v1791 = vpack.c.b16 %v1783, %v1782
        %1800 = vmatprep.subr.bf16.mxu0 0
        %1801 = vmatpush1.bf16.msra.mxu0 %v1791
        %1802 = vmatprep.subr.bf16.mxu0 0
        %1803 = vmatpush1.bf16.msra.mxu0 %v1790
        %1804 = vmatprep.subr.bf16.mxu0 0
        %1805 = vmatpush1.bf16.msra.mxu0 %v1789
        %1806 = vmatprep.subr.bf16.mxu0 0
        %1807 = vmatpush1.bf16.msra.mxu0 %v1788
        %1808 = vmatprep.subr.bf16.mxu0 0
        %1809 = vmatpush1.bf16.msra.mxu0 %v1787
        %1810 = vmatprep.subr.bf16.mxu0 0
        %1811 = vmatpush1.bf16.msra.mxu0 %v1786
        %1812 = vmatprep.subr.bf16.mxu0 0
        %1813 = vmatpush1.bf16.msra.mxu0 %v1785
        %1814 = vmatprep.subr.bf16.mxu0 0
        %1815 = vmatpush1.bf16.msra.mxu0 %v1784
        %1816 = vmatprep.subr.bf16.mxu0 0
        %1817 = vmatpush2.bf16.msra.mxu0 0
        %1818 = vmatprep.subr.bf16.mxu0 0
        %1819 = vmatpush2.bf16.msra.mxu0 0
        %1820 = vmatprep.subr.bf16.mxu0 0
        %1821 = vmatpush2.bf16.msra.mxu0 0
        %1822 = vmatprep.subr.bf16.mxu0 0
        %1823 = vmatpush2.bf16.msra.mxu0 0
        %1824 = vmatprep.subr.bf16.mxu0 0
        %1825 = vmatpush2.bf16.msra.mxu0 0
        %1826 = vmatprep.subr.bf16.mxu0 0
        %1827 = vmatpush2.bf16.msra.mxu0 0
        %1828 = vmatprep.subr.bf16.mxu0 0
        %1829 = vmatpush2.bf16.msra.mxu0 0
        %1830 = vmatprep.subr.bf16.mxu0 0
        %1831 = vmatpush2.bf16.msra.mxu0 0
        %1832 = vmatprep.mubr.bf16.mxu0 0
        %1833 = vmatmul.mubr.bf16.gmra.mxu0 %v1728
        %v1834 = vpop.f32.mrf.mxu0
        %v1835 = vadd.f32 %v1750, %v1834
        %v1836 = vpop.f32.mrf.mxu0
        %v1837 = vpop.f32.mrf.mxu0
        %v1838 = vadd.f32 %v1750, %v1837
        %v1839 = vpop.f32.mrf.mxu0
        %1840 = vdwg.mxu0
        %v1841 = vadd.f32 %v1656, %v1835
        %v1842 = vadd.f32 %v1657, %v1838
        %v1843 = vld [vmem:[%s687] sm:$0x1]
        %v1844 = vld [vmem:[%s690] sm:$0x1]
        %v1845 = vsel %vm808, %v1841, 0.0
        %1846 = vadd.xlane.f32.xlu0 %v1845
        %v1847 = vpop.xlane.xlu0 %1846
        %v1848 = vsel %vm808, %v1842, 0.0
        %1849 = vadd.xlane.f32.xlu0 %v1848
        %v1850 = vpop.xlane.xlu0 %1849
        %v1851 = vmul.f32 %v1847, %v1621
        %v1852 = vmul.f32 %v1850, %v1621
        %v1853 = vsub.f32 %v1841, %v1851
        %v1854 = vsub.f32 %v1842, %v1852
        %v1855 = vmul.f32 %v1853, %v1853
        %v1856 = vmul.f32 %v1854, %v1854
        %v1857 = vsel %vm808, %v1855, 0.0
        %1858 = vadd.xlane.f32.xlu0 %v1857
        %v1859 = vpop.xlane.xlu0 %1858
        %v1860 = vsel %vm808, %v1856, 0.0
        %1861 = vadd.xlane.f32.xlu0 %v1860
        %v1862 = vpop.xlane.xlu0 %1861
        %v1863 = vmul.f32 %v1859, %v1621
        %v1864 = vmul.f32 %v1862, %v1621
        %v1865 = vadd.f32 %v1863, 1e-05
        %v1866 = vadd.f32 %v1864, 1e-05
        %v1867 = vrsqrt.pop %v1865
        %v1868 = vrsqrt.pop %v1866
        %v1869 = vmul.f32 %v1853, %v1867
        %v1870 = vmul.f32 %v1854, %v1868
        %v1872 = vlaneseq
        %v1873 = vshrl.u32 %v1872, 7
        %v1874 = vsub.s32 0, %v1873
        %v1875 = vrot.slane %v1843, %v1874
        %v1877 = vmul.f32 %v1869, %v1875
        %v1878 = vmul.f32 %v1870, %v1875
        %v1880 = vlaneseq
        %v1881 = vshrl.u32 %v1880, 7
        %v1882 = vsub.s32 0, %v1881
        %v1883 = vrot.slane %v1844, %v1882
        %v1885 = vadd.f32 %v1877, %v1883
        %v1886 = vadd.f32 %v1878, %v1883
        %1887 = vst.msk [vmem:[#allocation2] sm:$0xff] %vm808, %v1885
        %1888 = vst.msk [vmem:[#allocation2 + $0x8] sm:$0xff] %vm808, %v1886
        %p1889 = scmp.eq.s32.totalorder %s29, 1
        // Predicated region
        $region93: #{tpu_custom_call.1} parent=87 // pred_check
          %p1890 = pneg %p1889
        $region94: #{tpu_custom_call.1} parent=87 // pred_check_branch
          %1892 = sbr.rel (%p1890) target = $region96
        $region95: #{tpu_custom_call.1} parent=87 // pred_region
          %vm1893 = vcmp.eq.s32.totalorder %v893, %v854
          %v1894 = vsel %vm1893, 0.125, 0.0
          %v1896 = vsel %vm952, %v1894, 0
          %1898 = vmatprep.subr.mxu0 0.0
          %1899 = vmatpush1.msra.mxu0 0.0
          %1900 = vmatprep.subr.mxu0 0.0
          %1901 = vmatpush1.msra.mxu0 0.0
          %1902 = vmatprep.subr.mxu0 0.0
          %1903 = vmatpush1.msra.mxu0 0.0
          %1904 = vmatprep.subr.mxu0 0.0
          %1905 = vmatpush1.msra.mxu0 0.0
          %1906 = vmatprep.subr.mxu0 0.0
          %1907 = vmatpush1.msra.mxu0 0.0
          %1908 = vmatprep.subr.mxu0 0.0
          %1909 = vmatpush1.msra.mxu0 0.0
          %1910 = vmatprep.subr.mxu0 0.0
          %1911 = vmatpush1.msra.mxu0 0.0
          %1912 = vmatprep.subr.mxu0 0.0
          %1913 = vmatpush1.msra.mxu0 0.0
          %1914 = vmatprep.subr.mxu0 0.0
          %1915 = vmatpush1.msra.mxu0 0.0
          %1916 = vmatprep.subr.mxu0 0.0
          %1917 = vmatpush1.msra.mxu0 0.0
          %1918 = vmatprep.subr.mxu0 0.0
          %1919 = vmatpush1.msra.mxu0 0.0
          %1920 = vmatprep.subr.mxu0 0.0
          %1921 = vmatpush1.msra.mxu0 0.0
          %1922 = vmatprep.subr.mxu0 0.0
          %1923 = vmatpush1.msra.mxu0 0.0
          %1924 = vmatprep.subr.mxu0 0.0
          %1925 = vmatpush1.msra.mxu0 0.0
          %1926 = vmatprep.subr.mxu0 0.0
          %1927 = vmatpush1.msra.mxu0 %v1886
          %1928 = vmatprep.subr.mxu0 0.0
          %1929 = vmatpush1.msra.mxu0 %v1885
          %1930 = vmatprep.subr.mxu0 0.0
          %1931 = vmatpush2.msra.mxu0 0.0
          %1932 = vmatprep.subr.mxu0 0.0
          %1933 = vmatpush2.msra.mxu0 0.0
          %1934 = vmatprep.subr.mxu0 0.0
          %1935 = vmatpush2.msra.mxu0 0.0
          %1936 = vmatprep.subr.mxu0 0.0
          %1937 = vmatpush2.msra.mxu0 0.0
          %1938 = vmatprep.subr.mxu0 0.0
          %1939 = vmatpush2.msra.mxu0 0.0
          %1940 = vmatprep.subr.mxu0 0.0
          %1941 = vmatpush2.msra.mxu0 0.0
          %1942 = vmatprep.subr.mxu0 0.0
          %1943 = vmatpush2.msra.mxu0 0.0
          %1944 = vmatprep.subr.mxu0 0.0
          %1945 = vmatpush2.msra.mxu0 0.0
          %1946 = vmatprep.subr.mxu0 0.0
          %1947 = vmatpush2.msra.mxu0 0.0
          %1948 = vmatprep.subr.mxu0 0.0
          %1949 = vmatpush2.msra.mxu0 0.0
          %1950 = vmatprep.subr.mxu0 0.0
          %1951 = vmatpush2.msra.mxu0 0.0
          %1952 = vmatprep.subr.mxu0 0.0
          %1953 = vmatpush2.msra.mxu0 0.0
          %1954 = vmatprep.subr.mxu0 0.0
          %1955 = vmatpush2.msra.mxu0 0.0
          %1956 = vmatprep.subr.mxu0 0.0
          %1957 = vmatpush2.msra.mxu0 0.0
          %1958 = vmatprep.subr.mxu0 0.0
          %1959 = vmatpush2.msra.mxu0 0.0
          %1960 = vmatprep.subr.mxu0 0.0
          %1961 = vmatpush2.msra.mxu0 0.0
          %1962 = vmatprep.mubr.f32.mxu0 0.0
          %1963 = vmatmul.mubr.f32.gmra.mxu0 %v1896
          %v1964 = vpop.f32.mrf.mxu0
          %v1965 = vadd.f32 0.0, %v1964
          %v1966 = vpop.f32.mrf.mxu0
          %1967 = vdwg.mxu0
          %v1968 = vpack.c.bf16 %v1965, %v1965
          %v1969 = vld [vmem:[%s15] sm:$0xf]
          %v1970 = vld [vmem:[%s15 + $0x4] sm:$0xf]
          %v1971 = vld [vmem:[%s15 + $0x8] sm:$0xf]
          %v1972 = vld [vmem:[%s15 + $0xc] sm:$0xf]
          %v1973 = vld [vmem:[%s16] sm:$0x1]
          %v1975 = vlaneseq
          %v1976 = vshrl.u32 %v1975, 7
          %v1977 = vsub.s32 0, %v1976
          %v1978 = vrot.slane %v1973, %v1977
          %v1984 = vunpack.c.l.b16 %v1969
          %v1985 = vunpack.c.l.b16 %v1970
          %v1986 = vunpack.c.l.b16 %v1971
          %v1987 = vunpack.c.l.b16 %v1972
          %v1988 = vpack.c.b16 %v1985, %v1984
          %v1989 = vpack.c.b16 %v1987, %v1986
          %v1993 = vsel %vm808, %v1968, 0
          %1995 = vmatprep.subr.bf16.mxu0 0
          %1996 = vmatpush1.bf16.msra.mxu0 0
          %1997 = vmatprep.subr.bf16.mxu0 0
          %1998 = vmatpush1.bf16.msra.mxu0 0
          %1999 = vmatprep.subr.bf16.mxu0 0
          %2000 = vmatpush1.bf16.msra.mxu0 0
          %2001 = vmatprep.subr.bf16.mxu0 0
          %2002 = vmatpush1.bf16.msra.mxu0 0
          %2003 = vmatprep.subr.bf16.mxu0 0
          %2004 = vmatpush1.bf16.msra.mxu0 0
          %2005 = vmatprep.subr.bf16.mxu0 0
          %2006 = vmatpush1.bf16.msra.mxu0 0
          %2007 = vmatprep.subr.bf16.mxu0 0
          %2008 = vmatpush1.bf16.msra.mxu0 %v1989
          %2009 = vmatprep.subr.bf16.mxu0 0
          %2010 = vmatpush1.bf16.msra.mxu0 %v1988
          %2011 = vmatprep.subr.bf16.mxu0 0
          %2012 = vmatpush2.bf16.msra.mxu0 0
          %2013 = vmatprep.subr.bf16.mxu0 0
          %2014 = vmatpush2.bf16.msra.mxu0 0
          %2015 = vmatprep.subr.bf16.mxu0 0
          %2016 = vmatpush2.bf16.msra.mxu0 0
          %2017 = vmatprep.subr.bf16.mxu0 0
          %2018 = vmatpush2.bf16.msra.mxu0 0
          %2019 = vmatprep.subr.bf16.mxu0 0
          %2020 = vmatpush2.bf16.msra.mxu0 0
          %2021 = vmatprep.subr.bf16.mxu0 0
          %2022 = vmatpush2.bf16.msra.mxu0 0
          %2023 = vmatprep.subr.bf16.mxu0 0
          %2024 = vmatpush2.bf16.msra.mxu0 0
          %2025 = vmatprep.subr.bf16.mxu0 0
          %2026 = vmatpush2.bf16.msra.mxu0 0
          %2027 = vmatprep.mubr.bf16.mxu0 0
          %2028 = vmatmul.mubr.bf16.gmra.mxu0 %v1993
          %v2029 = vpop.f32.mrf.mxu0
          %v2030 = vadd.f32 %v1978, %v2029
          %v2031 = vpop.f32.mrf.mxu0
          %v2032 = vpop.f32.mrf.mxu0
          %v2033 = vpop.f32.mrf.mxu0
          %2034 = vdwg.mxu0
          %2035 = vst [vmem:[#allocation3] sm:$0x3] %v2030
        $region96: #{tpu_custom_call.1} parent=87 // pred_fallthru
          _
        // Predicated region
        $region97: #{tpu_custom_call.1} parent=87 // pred_check
          %p2036 = pneg %p459
        $region98: #{tpu_custom_call.1} parent=87 // pred_check_branch
          %2038 = sbr.rel (%p2036) target = $region100
        $region99: #{tpu_custom_call.1} parent=87 // pred_region
          %s2040 = ssub.s32 32, 32
          %2041 = vsyncadd [#allocation4], %s2040
          %s2043 = sshll.u32 [#allocation3], 4
          %s2044 = int_to_ptr.vmem [resolvable:$true] %s2043
          %2046 = dma.vmem_to_hbm [thread:$0]  %s2044, 32, %s17, [#allocation4]
        $region100: #{tpu_custom_call.1} parent=87 // pred_fallthru
          _
        // Predicated region
        $region101: #{tpu_custom_call.1} parent=87 // pred_check
          %p2047 = pneg %p459
        $region102: #{tpu_custom_call.1} parent=87 // pred_check_branch
          %2049 = sbr.rel (%p2047) target = $region104
        $region103: #{tpu_custom_call.1} parent=87 // pred_region
          %2050 = dma.done [#allocation4], 32
        $region104: #{tpu_custom_call.1} parent=87 // pred_fallthru
          _
      $region88: #{tpu_custom_call.1} parent=5 // pred_fallthru
        _
      %p2051 = scmp.le.s32.totalorder 2, %s24
      // Predicated region
      $region105: #{tpu_custom_call.1} parent=5 // pred_check
        %p2052 = pneg %p2051
      $region106: #{tpu_custom_call.1} parent=5 // pred_check_branch
        %2054 = sbr.rel (%p2052) target = $region108
      $region107: #{tpu_custom_call.1} parent=5 // pred_region
        %s2055 = ssub.s32 %s24, 2
      $region108: #{tpu_custom_call.1} parent=5 // pred_fallthru
        _
    $region6: #{tpu_custom_call.1} parent=1 // loop_footer
      %s28 = sadd.s32 1, %s24
    $region7: #{tpu_custom_call.1} parent=1 // loop_footer_branch
      %23 = sbr.rel target = $region3
    $region8: #{tpu_custom_call.1} parent=1 // loop_exit
      _
    %2056 = vsyncpa [#allocation4], 1
    %s2057 = scalar_lea.sflag [#allocation4], 1
    %2058 = vsyncpa %s2057, 1

</llo_original>
